<compile_context>
chip_gen: v7x
topology: tpu7x:2x2x1
jax: 0.10.0
libtpu: 0.0.40
codegen_flags: <defaults>
</compile_context>

<pallas_src>
import jax
import jax.numpy as jnp
from jax.experimental import pallas as pl
from jax.experimental.pallas import tpu as pltpu


# --------------------------------- helpers ----------------------------------
def _round_up(x, m):
    return ((x + m - 1) // m) * m


def _interleave_gates(wf, wb, H):
    """Columns [i,f,g,o] of two directions -> [i_f,i_b,f_f,f_b,g_f,g_b,o_f,o_b]."""
    blocks = []
    for k in range(4):
        blocks.append(wf[..., k * H:(k + 1) * H])
        blocks.append(wb[..., k * H:(k + 1) * H])
    return jnp.concatenate(blocks, axis=-1)


# --------------------------------- kernel -----------------------------------
def _bilstm_attn_kernel(pg_ref, h0_ref, c0_ref, whh_ref,
                        fcwf_ref, fcwb_ref, fcb_ref,
                        logits_ref,
                        outf_ref, outb_ref):
    T = pg_ref.shape[0]
    H2 = h0_ref.shape[1]          # 2*H: forward | backward fused along lanes
    H = H2 // 2

    whh = whh_ref[...]            # load recurrent weights once, before the loop
    h = h0_ref[...]               # (bb, 2H) = [h_fwd | h_bwd]
    c = c0_ref[...]               # (bb, 2H) = [c_fwd | c_bwd]

    # ---- fused forward+backward recurrence (serial critical path) ----------
    # pre-gates pg_ref[t] are already bias-added and time-aligned:
    #   forward-gate columns come from x[t], backward-gate columns from x[T-1-t]
    # gate column layout: [i_f,i_b | f_f,f_b | g_f,g_b | o_f,o_b], each block H.
    for t in range(T):            # static unroll: scheduler sees across steps
        gates = pg_ref[t] + jnp.dot(h, whh, preferred_element_type=jnp.float32)
        i = jax.nn.sigmoid(gates[:, 0 * H2:1 * H2])
        f = jax.nn.sigmoid(gates[:, 1 * H2:2 * H2])
        g = jnp.tanh(gates[:, 2 * H2:3 * H2])
        o = jax.nn.sigmoid(gates[:, 3 * H2:4 * H2])
        c = f * c + i * g
        h = o * jnp.tanh(c)
        outf_ref[t] = h[:, :H]            # forward hidden for position t
        outb_ref[T - 1 - t] = h[:, H:]    # backward hidden for position T-1-t

    # ---- attention over T: per-direction, no lane-axis concatenation -------
    out_f = outf_ref[...]                 # (T, bb, H)
    out_b = outb_ref[...]                 # (T, bb, H)
    m_f = h[:, :H]                        # final forward hidden
    m_b = h[:, H:]                        # final backward hidden
    scores = (jnp.sum(out_f * m_f[None, :, :], axis=-1, keepdims=True)
              + jnp.sum(out_b * m_b[None, :, :], axis=-1, keepdims=True))  # (T,bb,1)
    smax = jnp.max(scores, axis=0, keepdims=True)
    e = jnp.exp(scores - smax)
    w = e * pl.reciprocal(jnp.sum(e, axis=0, keepdims=True), approx=True)  # (T,bb,1)
    attn_f = jnp.sum(out_f * w, axis=0)   # (bb, H)
    attn_b = jnp.sum(out_b * w, axis=0)   # (bb, H)

    # ---- split FC, lane-dense (C padded to 128) output ----------------------
    logits_ref[...] = (
        jnp.dot(attn_f, fcwf_ref[...], preferred_element_type=jnp.float32)
        + jnp.dot(attn_b, fcwb_ref[...], preferred_element_type=jnp.float32)
        + fcb_ref[...])


# --------------------------------- wrapper ----------------------------------
def attn_bilstm_forward(tokens, params, h0, c0):
    B, T = tokens.shape
    H = params["whh_f"].shape[0]
    C = params["fc_w"].shape[1]

    # glue (XLA): embedding lookup (nn.Embedding, padding_idx=0, max_norm=5.0)
    emb = params["embedding"][tokens]                              # (B, T, E)
    norms = jnp.sqrt(jnp.sum(emb * emb, axis=-1, keepdims=True))
    scale = jnp.where(norms > 5.0, 5.0 / (norms + 1e-7), 1.0)
    emb = (emb * scale).astype(jnp.float32)

    # shape for the hardware: pad batch to a sublane-aligned block
    bb = min(_round_up(B, 8), 64)           # batch block (multiple of 8)
    Bp = _round_up(B, bb)
    Cp = _round_up(C, 128)                  # lane-dense FC output
    emb = jnp.pad(emb, ((0, Bp - B), (0, 0), (0, 0)))
    x_tm = jnp.transpose(emb, (1, 0, 2))    # (T, Bp, E) time-major

    # hoisted input projection: ONE (T*Bp, E) @ (E, 8H) GEMM for all timesteps
    # and both directions (done here in the wrapper per the review).
    wih_il = _interleave_gates(params["wih_f"], params["wih_b"], H)   # (E, 8H)
    b_il = _interleave_gates(params["b_f"], params["b_b"], H)         # (1, 8H)
    pg = jnp.einsum("tbe,eg->tbg", x_tm, wih_il) + b_il               # (T, Bp, 8H)
    # time-align backward-direction columns so step t reads a single slab
    bwd_col = ((jnp.arange(8 * H) // H) % 2) == 1
    pg = jnp.where(bwd_col, pg[::-1], pg)

    # fused block-diagonal recurrent weights: (2H, 8H), same gate-column layout
    zH = jnp.zeros((H, 4 * H), jnp.float32)
    whh_comb = _interleave_gates(
        jnp.concatenate([params["whh_f"], zH], axis=0),
        jnp.concatenate([zH, params["whh_b"]], axis=0), H)            # (2H, 8H)

    # initial states as one (Bp, 2H) slab: [forward | backward]
    h0_cat = jnp.pad(jnp.concatenate([h0[0], h0[1]], axis=-1),
                     ((0, Bp - B), (0, 0)))
    c0_cat = jnp.pad(jnp.concatenate([c0[0], c0[1]], axis=-1),
                     ((0, Bp - B), (0, 0)))

    # split + lane-pad the FC
    fcw_f = jnp.pad(params["fc_w"][:H], ((0, 0), (0, Cp - C)))        # (H, Cp)
    fcw_b = jnp.pad(params["fc_w"][H:], ((0, 0), (0, Cp - C)))        # (H, Cp)
    fcb = jnp.pad(params["fc_b"], ((0, 0), (0, Cp - C)))              # (1, Cp)

    nb = Bp // bb
    grid_spec = pltpu.PrefetchScalarGridSpec(
        num_scalar_prefetch=0,
        grid=(nb,),
        in_specs=[
            pl.BlockSpec((T, bb, 8 * H), lambda i: (0, i, 0)),   # pre-gates
            pl.BlockSpec((bb, 2 * H), lambda i: (i, 0)),         # h0
            pl.BlockSpec((bb, 2 * H), lambda i: (i, 0)),         # c0
            pl.BlockSpec((2 * H, 8 * H), lambda i: (0, 0)),      # whh (fused)
            pl.BlockSpec((H, Cp), lambda i: (0, 0)),             # fc_w fwd
            pl.BlockSpec((H, Cp), lambda i: (0, 0)),             # fc_w bwd
            pl.BlockSpec((1, Cp), lambda i: (0, 0)),             # fc_b
        ],
        out_specs=pl.BlockSpec((bb, Cp), lambda i: (i, 0)),
        scratch_shapes=[
            pltpu.VMEM((T, bb, H), jnp.float32),   # forward hidden sequence
            pltpu.VMEM((T, bb, H), jnp.float32),   # backward hidden sequence
        ],
    )
    kernel = pl.pallas_call(
        _bilstm_attn_kernel,
        out_shape=jax.ShapeDtypeStruct((Bp, Cp), jnp.float32),
        grid_spec=grid_spec,
        compiler_params=pltpu.CompilerParams(
            dimension_semantics=("parallel",)),
    )
    logits = kernel(pg, h0_cat, c0_cat, whh_comb, fcw_f, fcw_b, fcb)
    return logits[:B, :C]


# ------------------------- deterministic parameter init ----------------------
def init_params(key, vocab_size, E, H, C):
    ks = jax.random.split(key, 11)

    def u(k, shape, bound):
        return jax.random.uniform(k, shape, jnp.float32, -bound, bound)

    emb = jax.random.normal(ks[0], (vocab_size, E), jnp.float32)
    emb = emb.at[0].set(0.0)                       # padding_idx=0

    k_lstm = 1.0 / (H ** 0.5)                      # PyTorch LSTM init scale
    wih_f = u(ks[1], (4 * H, E), k_lstm)
    whh_f = u(ks[2], (4 * H, H), k_lstm)
    bih_f = u(ks[3], (4 * H,), k_lstm)
    bhh_f = u(ks[4], (4 * H,), k_lstm)
    wih_b = u(ks[5], (4 * H, E), k_lstm)
    whh_b = u(ks[6], (4 * H, H), k_lstm)
    bih_b = u(ks[7], (4 * H,), k_lstm)
    bhh_b = u(ks[8], (4 * H,), k_lstm)

    k_fc = 1.0 / ((2 * H) ** 0.5)
    fc_w = u(ks[9], (C, 2 * H), k_fc)
    fc_b = u(ks[10], (C,), k_fc)

    return {
        "embedding": emb,
        "wih_f": wih_f.T, "whh_f": whh_f.T, "b_f": (bih_f + bhh_f)[None, :],
        "wih_b": wih_b.T, "whh_b": whh_b.T, "b_b": (bih_b + bhh_b)[None, :],
        "fc_w": fc_w.T, "fc_b": fc_b[None, :],
    }


def xavier_normal(key, shape):
    # torch.nn.init.xavier_normal_ on (2, B, H): fan_in = B*H, fan_out = 2*H
    fan_in = shape[1] * shape[2]
    fan_out = shape[0] * shape[2]
    std = (2.0 / (fan_in + fan_out)) ** 0.5
    return std * jax.random.normal(key, shape, jnp.float32)


# -------------------------- pure-JAX reference (check) -----------------------
def reference_forward(tokens, params, h0, c0):
    emb = params["embedding"][tokens]
    norms = jnp.sqrt(jnp.sum(emb * emb, axis=-1, keepdims=True))
    scale = jnp.where(norms > 5.0, 5.0 / (norms + 1e-7), 1.0)
    x = (emb * scale).astype(jnp.float32)          # (B, T, E)
    B, T, _E = x.shape
    H = params["whh_f"].shape[0]

    def cell(xt, h, c, wih, whh, b):
        gates = xt @ wih + h @ whh + b
        i = jax.nn.sigmoid(gates[:, :H]); f = jax.nn.sigmoid(gates[:, H:2 * H])
        g = jnp.tanh(gates[:, 2 * H:3 * H]); o = jax.nn.sigmoid(gates[:, 3 * H:])
        c = f * c + i * g
        return o * jnp.tanh(c), c

    h_f, c_f, h_b, c_b = h0[0], c0[0], h0[1], c0[1]
    outs_f, outs_b = [], [None] * T
    for t in range(T):
        h_f, c_f = cell(x[:, t], h_f, c_f,
                        params["wih_f"], params["whh_f"], params["b_f"])
        outs_f.append(h_f)
        tb = T - 1 - t
        h_b, c_b = cell(x[:, tb], h_b, c_b,
                        params["wih_b"], params["whh_b"], params["b_b"])
        outs_b[tb] = h_b
    out = jnp.concatenate([jnp.stack(outs_f, axis=1),
                           jnp.stack(outs_b, axis=1)], axis=-1)   # (B, T, 2H)
    merged = jnp.concatenate([h_f, h_b], axis=-1)                  # (B, 2H)
    scores = jnp.einsum('bth,bh->bt', out, merged)
    w = jax.nn.softmax(scores, axis=1)
    attn = jnp.einsum('bth,bt->bh', out, w)
    return attn @ params["fc_w"] + params["fc_b"]


if __name__ == "__main__":
    VOCAB, E, H, C = 50, 32, 32, 3    # vocab, embed_dim, hidden_size, n_classes
    B, T = 2, 8

    key = jax.random.PRNGKey(0)
    kp, kt, kh, kc = jax.random.split(key, 4)
    params = init_params(kp, VOCAB, E, H, C)
    tokens = jax.random.randint(kt, (B, T), 0, VOCAB, dtype=jnp.int32)
    # PyTorch forward draws fresh xavier-normal h/c each call; fixed seed here.
    h0 = xavier_normal(kh, (2, B, H))
    c0 = xavier_normal(kc, (2, B, H))

    logits = attn_bilstm_forward(tokens, params, h0, c0)
    logits = jax.block_until_ready(logits)

    ref = reference_forward(tokens, params, h0, c0)
    assert logits.shape == (B, C)
    assert float(jnp.max(jnp.abs(logits - ref))) < 2e-3

    print("KERNEL_OK")
</pallas_src>

<mosaic_0001>
module attributes {stable_mosaic.version = 11 : i64} {
  func.func @_bilstm_attn_kernel(%arg0: i32, %arg1: memref<8x8x256xf32, #tpu.memory_space<vmem>>, %arg2: memref<8x64xf32, #tpu.memory_space<vmem>>, %arg3: memref<8x64xf32, #tpu.memory_space<vmem>>, %arg4: memref<64x256xf32, #tpu.memory_space<vmem>>, %arg5: memref<32x128xf32, #tpu.memory_space<vmem>>, %arg6: memref<32x128xf32, #tpu.memory_space<vmem>>, %arg7: memref<1x128xf32, #tpu.memory_space<vmem>>, %arg8: memref<8x128xf32, #tpu.memory_space<vmem>>, %arg9: memref<8x8x32xf32, #tpu.memory_space<vmem>>, %arg10: memref<8x8x32xf32, #tpu.memory_space<vmem>>) attributes {dimension_semantics = [#tpu.dimension_semantics<parallel>], iteration_bounds = array<i64: 1>, scalar_prefetch = 0 : i64, scratch_operands = 2 : i64, tpu.core_type = #tpu.core_type<tc>, window_params = [{transform_indices = @transform_0, window_bounds = array<i64: 8, 8, 256>}, {transform_indices = @transform_1, window_bounds = array<i64: 8, 64>}, {transform_indices = @transform_2, window_bounds = array<i64: 8, 64>}, {pipeline_mode = #tpu.pipeline_mode<synchronous>, transform_indices = @transform_3, window_bounds = array<i64: 64, 256>}, {pipeline_mode = #tpu.pipeline_mode<synchronous>, transform_indices = @transform_4, window_bounds = array<i64: 32, 128>}, {pipeline_mode = #tpu.pipeline_mode<synchronous>, transform_indices = @transform_5, window_bounds = array<i64: 32, 128>}, {pipeline_mode = #tpu.pipeline_mode<synchronous>, transform_indices = @transform_6, window_bounds = array<i64: 1, 128>}, {transform_indices = @transform_7, window_bounds = array<i64: 8, 128>}]} {
    %c0 = arith.constant 0 : index
    %c0_0 = arith.constant 0 : index
    %0 = vector.load %arg4[%c0, %c0_0] : memref<64x256xf32, #tpu.memory_space<vmem>>, vector<64x256xf32>
    %c0_1 = arith.constant 0 : index
    %c0_2 = arith.constant 0 : index
    %1 = vector.load %arg2[%c0_1, %c0_2] : memref<8x64xf32, #tpu.memory_space<vmem>>, vector<8x64xf32>
    %c0_3 = arith.constant 0 : index
    %c0_4 = arith.constant 0 : index
    %2 = vector.load %arg3[%c0_3, %c0_4] : memref<8x64xf32, #tpu.memory_space<vmem>>, vector<8x64xf32>
    %c0_5 = arith.constant 0 : index
    %c0_6 = arith.constant 0 : index
    %c0_7 = arith.constant 0 : index
    %3 = vector.load %arg1[%c0_5, %c0_6, %c0_7] : memref<8x8x256xf32, #tpu.memory_space<vmem>>, vector<1x8x256xf32>
    %4 = vector.shape_cast %3 : vector<1x8x256xf32> to vector<8x256xf32>
    %cst = arith.constant dense<0.000000e+00> : vector<8x256xf32>
    %5 = tpu.matmul %1, %0, %cst {dimension_numbers = #tpu.dot_dimension_numbers<[1], [0], [0], [1], [0, 0, 1, 1], [], []>} : vector<8x64xf32>, vector<64x256xf32>, vector<8x256xf32> -> vector<8x256xf32>
    %6 = arith.addf %4, %5 : vector<8x256xf32>
    %7 = vector.extract_strided_slice %6 {offsets = [0, 0], sizes = [8, 64], strides = [1, 1]} : vector<8x256xf32> to vector<8x64xf32>
    %8 = arith.negf %7 : vector<8x64xf32>
    %9 = math.exp %8 : vector<8x64xf32>
    %cst_8 = arith.constant 1.000000e+00 : f32
    %10 = vector.broadcast %cst_8 : f32 to vector<8x64xf32>
    %11 = arith.addf %10, %9 : vector<8x64xf32>
    %12 = arith.divf %10, %11 : vector<8x64xf32>
    %13 = vector.extract_strided_slice %6 {offsets = [0, 64], sizes = [8, 64], strides = [1, 1]} : vector<8x256xf32> to vector<8x64xf32>
    %14 = arith.negf %13 : vector<8x64xf32>
    %15 = math.exp %14 : vector<8x64xf32>
    %cst_9 = arith.constant 1.000000e+00 : f32
    %16 = vector.broadcast %cst_9 : f32 to vector<8x64xf32>
    %17 = arith.addf %16, %15 : vector<8x64xf32>
    %18 = arith.divf %16, %17 : vector<8x64xf32>
    %19 = vector.extract_strided_slice %6 {offsets = [0, 128], sizes = [8, 64], strides = [1, 1]} : vector<8x256xf32> to vector<8x64xf32>
    %20 = math.tanh %19 : vector<8x64xf32>
    %21 = vector.extract_strided_slice %6 {offsets = [0, 192], sizes = [8, 64], strides = [1, 1]} : vector<8x256xf32> to vector<8x64xf32>
    %22 = arith.negf %21 : vector<8x64xf32>
    %23 = math.exp %22 : vector<8x64xf32>
    %cst_10 = arith.constant 1.000000e+00 : f32
    %24 = vector.broadcast %cst_10 : f32 to vector<8x64xf32>
    %25 = arith.addf %24, %23 : vector<8x64xf32>
    %26 = arith.divf %24, %25 : vector<8x64xf32>
    %27 = arith.mulf %18, %2 : vector<8x64xf32>
    %28 = arith.mulf %12, %20 : vector<8x64xf32>
    %29 = arith.addf %27, %28 : vector<8x64xf32>
    %30 = math.tanh %29 : vector<8x64xf32>
    %31 = arith.mulf %26, %30 : vector<8x64xf32>
    %32 = vector.extract_strided_slice %31 {offsets = [0, 0], sizes = [8, 32], strides = [1, 1]} : vector<8x64xf32> to vector<8x32xf32>
    %c0_11 = arith.constant 0 : index
    %c0_12 = arith.constant 0 : index
    %c0_13 = arith.constant 0 : index
    %33 = vector.load %arg9[%c0_11, %c0_12, %c0_13] : memref<8x8x32xf32, #tpu.memory_space<vmem>>, vector<1x8x32xf32>
    %34 = vector.shape_cast %33 : vector<1x8x32xf32> to vector<8x32xf32>
    %35 = vector.shape_cast %32 : vector<8x32xf32> to vector<1x8x32xf32>
    tpu.vector_store %arg9[%c0_11, %c0_12, %c0_13], %35 {strides = array<i32>} : memref<8x8x32xf32, #tpu.memory_space<vmem>>, vector<1x8x32xf32>,
    %36 = vector.extract_strided_slice %31 {offsets = [0, 32], sizes = [8, 32], strides = [1, 1]} : vector<8x64xf32> to vector<8x32xf32>
    %c7 = arith.constant 7 : index
    %c0_14 = arith.constant 0 : index
    %c0_15 = arith.constant 0 : index
    %37 = vector.load %arg10[%c7, %c0_14, %c0_15] : memref<8x8x32xf32, #tpu.memory_space<vmem>>, vector<1x8x32xf32>
    %38 = vector.shape_cast %37 : vector<1x8x32xf32> to vector<8x32xf32>
    %39 = vector.shape_cast %36 : vector<8x32xf32> to vector<1x8x32xf32>
    tpu.vector_store %arg10[%c7, %c0_14, %c0_15], %39 {strides = array<i32>} : memref<8x8x32xf32, #tpu.memory_space<vmem>>, vector<1x8x32xf32>,
    %c1 = arith.constant 1 : index
    %c0_16 = arith.constant 0 : index
    %c0_17 = arith.constant 0 : index
    %40 = vector.load %arg1[%c1, %c0_16, %c0_17] : memref<8x8x256xf32, #tpu.memory_space<vmem>>, vector<1x8x256xf32>
    %41 = vector.shape_cast %40 : vector<1x8x256xf32> to vector<8x256xf32>
    %cst_18 = arith.constant dense<0.000000e+00> : vector<8x256xf32>
    %42 = tpu.matmul %31, %0, %cst_18 {dimension_numbers = #tpu.dot_dimension_numbers<[1], [0], [0], [1], [0, 0, 1, 1], [], []>} : vector<8x64xf32>, vector<64x256xf32>, vector<8x256xf32> -> vector<8x256xf32>
    %43 = arith.addf %41, %42 : vector<8x256xf32>
    %44 = vector.extract_strided_slice %43 {offsets = [0, 0], sizes = [8, 64], strides = [1, 1]} : vector<8x256xf32> to vector<8x64xf32>
    %45 = arith.negf %44 : vector<8x64xf32>
    %46 = math.exp %45 : vector<8x64xf32>
    %cst_19 = arith.constant 1.000000e+00 : f32
    %47 = vector.broadcast %cst_19 : f32 to vector<8x64xf32>
    %48 = arith.addf %47, %46 : vector<8x64xf32>
    %49 = arith.divf %47, %48 : vector<8x64xf32>
    %50 = vector.extract_strided_slice %43 {offsets = [0, 64], sizes = [8, 64], strides = [1, 1]} : vector<8x256xf32> to vector<8x64xf32>
    %51 = arith.negf %50 : vector<8x64xf32>
    %52 = math.exp %51 : vector<8x64xf32>
    %cst_20 = arith.constant 1.000000e+00 : f32
    %53 = vector.broadcast %cst_20 : f32 to vector<8x64xf32>
    %54 = arith.addf %53, %52 : vector<8x64xf32>
    %55 = arith.divf %53, %54 : vector<8x64xf32>
    %56 = vector.extract_strided_slice %43 {offsets = [0, 128], sizes = [8, 64], strides = [1, 1]} : vector<8x256xf32> to vector<8x64xf32>
    %57 = math.tanh %56 : vector<8x64xf32>
    %58 = vector.extract_strided_slice %43 {offsets = [0, 192], sizes = [8, 64], strides = [1, 1]} : vector<8x256xf32> to vector<8x64xf32>
    %59 = arith.negf %58 : vector<8x64xf32>
    %60 = math.exp %59 : vector<8x64xf32>
    %cst_21 = arith.constant 1.000000e+00 : f32
    %61 = vector.broadcast %cst_21 : f32 to vector<8x64xf32>
    %62 = arith.addf %61, %60 : vector<8x64xf32>
    %63 = arith.divf %61, %62 : vector<8x64xf32>
    %64 = arith.mulf %55, %29 : vector<8x64xf32>
    %65 = arith.mulf %49, %57 : vector<8x64xf32>
    %66 = arith.addf %64, %65 : vector<8x64xf32>
    %67 = math.tanh %66 : vector<8x64xf32>
    %68 = arith.mulf %63, %67 : vector<8x64xf32>
    %69 = vector.extract_strided_slice %68 {offsets = [0, 0], sizes = [8, 32], strides = [1, 1]} : vector<8x64xf32> to vector<8x32xf32>
    %c1_22 = arith.constant 1 : index
    %c0_23 = arith.constant 0 : index
    %c0_24 = arith.constant 0 : index
    %70 = vector.load %arg9[%c1_22, %c0_23, %c0_24] : memref<8x8x32xf32, #tpu.memory_space<vmem>>, vector<1x8x32xf32>
    %71 = vector.shape_cast %70 : vector<1x8x32xf32> to vector<8x32xf32>
    %72 = vector.shape_cast %69 : vector<8x32xf32> to vector<1x8x32xf32>
    tpu.vector_store %arg9[%c1_22, %c0_23, %c0_24], %72 {strides = array<i32>} : memref<8x8x32xf32, #tpu.memory_space<vmem>>, vector<1x8x32xf32>,
    %73 = vector.extract_strided_slice %68 {offsets = [0, 32], sizes = [8, 32], strides = [1, 1]} : vector<8x64xf32> to vector<8x32xf32>
    %c6 = arith.constant 6 : index
    %c0_25 = arith.constant 0 : index
    %c0_26 = arith.constant 0 : index
    %74 = vector.load %arg10[%c6, %c0_25, %c0_26] : memref<8x8x32xf32, #tpu.memory_space<vmem>>, vector<1x8x32xf32>
    %75 = vector.shape_cast %74 : vector<1x8x32xf32> to vector<8x32xf32>
    %76 = vector.shape_cast %73 : vector<8x32xf32> to vector<1x8x32xf32>
    tpu.vector_store %arg10[%c6, %c0_25, %c0_26], %76 {strides = array<i32>} : memref<8x8x32xf32, #tpu.memory_space<vmem>>, vector<1x8x32xf32>,
    %c2 = arith.constant 2 : index
    %c0_27 = arith.constant 0 : index
    %c0_28 = arith.constant 0 : index
    %77 = vector.load %arg1[%c2, %c0_27, %c0_28] : memref<8x8x256xf32, #tpu.memory_space<vmem>>, vector<1x8x256xf32>
    %78 = vector.shape_cast %77 : vector<1x8x256xf32> to vector<8x256xf32>
    %cst_29 = arith.constant dense<0.000000e+00> : vector<8x256xf32>
    %79 = tpu.matmul %68, %0, %cst_29 {dimension_numbers = #tpu.dot_dimension_numbers<[1], [0], [0], [1], [0, 0, 1, 1], [], []>} : vector<8x64xf32>, vector<64x256xf32>, vector<8x256xf32> -> vector<8x256xf32>
    %80 = arith.addf %78, %79 : vector<8x256xf32>
    %81 = vector.extract_strided_slice %80 {offsets = [0, 0], sizes = [8, 64], strides = [1, 1]} : vector<8x256xf32> to vector<8x64xf32>
    %82 = arith.negf %81 : vector<8x64xf32>
    %83 = math.exp %82 : vector<8x64xf32>
    %cst_30 = arith.constant 1.000000e+00 : f32
    %84 = vector.broadcast %cst_30 : f32 to vector<8x64xf32>
    %85 = arith.addf %84, %83 : vector<8x64xf32>
    %86 = arith.divf %84, %85 : vector<8x64xf32>
    %87 = vector.extract_strided_slice %80 {offsets = [0, 64], sizes = [8, 64], strides = [1, 1]} : vector<8x256xf32> to vector<8x64xf32>
    %88 = arith.negf %87 : vector<8x64xf32>
    %89 = math.exp %88 : vector<8x64xf32>
    %cst_31 = arith.constant 1.000000e+00 : f32
    %90 = vector.broadcast %cst_31 : f32 to vector<8x64xf32>
    %91 = arith.addf %90, %89 : vector<8x64xf32>
    %92 = arith.divf %90, %91 : vector<8x64xf32>
    %93 = vector.extract_strided_slice %80 {offsets = [0, 128], sizes = [8, 64], strides = [1, 1]} : vector<8x256xf32> to vector<8x64xf32>
    %94 = math.tanh %93 : vector<8x64xf32>
    %95 = vector.extract_strided_slice %80 {offsets = [0, 192], sizes = [8, 64], strides = [1, 1]} : vector<8x256xf32> to vector<8x64xf32>
    %96 = arith.negf %95 : vector<8x64xf32>
    %97 = math.exp %96 : vector<8x64xf32>
    %cst_32 = arith.constant 1.000000e+00 : f32
    %98 = vector.broadcast %cst_32 : f32 to vector<8x64xf32>
    %99 = arith.addf %98, %97 : vector<8x64xf32>
    %100 = arith.divf %98, %99 : vector<8x64xf32>
    %101 = arith.mulf %92, %66 : vector<8x64xf32>
    %102 = arith.mulf %86, %94 : vector<8x64xf32>
    %103 = arith.addf %101, %102 : vector<8x64xf32>
    %104 = math.tanh %103 : vector<8x64xf32>
    %105 = arith.mulf %100, %104 : vector<8x64xf32>
    %106 = vector.extract_strided_slice %105 {offsets = [0, 0], sizes = [8, 32], strides = [1, 1]} : vector<8x64xf32> to vector<8x32xf32>
    %c2_33 = arith.constant 2 : index
    %c0_34 = arith.constant 0 : index
    %c0_35 = arith.constant 0 : index
    %107 = vector.load %arg9[%c2_33, %c0_34, %c0_35] : memref<8x8x32xf32, #tpu.memory_space<vmem>>, vector<1x8x32xf32>
    %108 = vector.shape_cast %107 : vector<1x8x32xf32> to vector<8x32xf32>
    %109 = vector.shape_cast %106 : vector<8x32xf32> to vector<1x8x32xf32>
    tpu.vector_store %arg9[%c2_33, %c0_34, %c0_35], %109 {strides = array<i32>} : memref<8x8x32xf32, #tpu.memory_space<vmem>>, vector<1x8x32xf32>,
    %110 = vector.extract_strided_slice %105 {offsets = [0, 32], sizes = [8, 32], strides = [1, 1]} : vector<8x64xf32> to vector<8x32xf32>
    %c5 = arith.constant 5 : index
    %c0_36 = arith.constant 0 : index
    %c0_37 = arith.constant 0 : index
    %111 = vector.load %arg10[%c5, %c0_36, %c0_37] : memref<8x8x32xf32, #tpu.memory_space<vmem>>, vector<1x8x32xf32>
    %112 = vector.shape_cast %111 : vector<1x8x32xf32> to vector<8x32xf32>
    %113 = vector.shape_cast %110 : vector<8x32xf32> to vector<1x8x32xf32>
    tpu.vector_store %arg10[%c5, %c0_36, %c0_37], %113 {strides = array<i32>} : memref<8x8x32xf32, #tpu.memory_space<vmem>>, vector<1x8x32xf32>,
    %c3 = arith.constant 3 : index
    %c0_38 = arith.constant 0 : index
    %c0_39 = arith.constant 0 : index
    %114 = vector.load %arg1[%c3, %c0_38, %c0_39] : memref<8x8x256xf32, #tpu.memory_space<vmem>>, vector<1x8x256xf32>
    %115 = vector.shape_cast %114 : vector<1x8x256xf32> to vector<8x256xf32>
    %cst_40 = arith.constant dense<0.000000e+00> : vector<8x256xf32>
    %116 = tpu.matmul %105, %0, %cst_40 {dimension_numbers = #tpu.dot_dimension_numbers<[1], [0], [0], [1], [0, 0, 1, 1], [], []>} : vector<8x64xf32>, vector<64x256xf32>, vector<8x256xf32> -> vector<8x256xf32>
    %117 = arith.addf %115, %116 : vector<8x256xf32>
    %118 = vector.extract_strided_slice %117 {offsets = [0, 0], sizes = [8, 64], strides = [1, 1]} : vector<8x256xf32> to vector<8x64xf32>
    %119 = arith.negf %118 : vector<8x64xf32>
    %120 = math.exp %119 : vector<8x64xf32>
    %cst_41 = arith.constant 1.000000e+00 : f32
    %121 = vector.broadcast %cst_41 : f32 to vector<8x64xf32>
    %122 = arith.addf %121, %120 : vector<8x64xf32>
    %123 = arith.divf %121, %122 : vector<8x64xf32>
    %124 = vector.extract_strided_slice %117 {offsets = [0, 64], sizes = [8, 64], strides = [1, 1]} : vector<8x256xf32> to vector<8x64xf32>
    %125 = arith.negf %124 : vector<8x64xf32>
    %126 = math.exp %125 : vector<8x64xf32>
    %cst_42 = arith.constant 1.000000e+00 : f32
    %127 = vector.broadcast %cst_42 : f32 to vector<8x64xf32>
    %128 = arith.addf %127, %126 : vector<8x64xf32>
    %129 = arith.divf %127, %128 : vector<8x64xf32>
    %130 = vector.extract_strided_slice %117 {offsets = [0, 128], sizes = [8, 64], strides = [1, 1]} : vector<8x256xf32> to vector<8x64xf32>
    %131 = math.tanh %130 : vector<8x64xf32>
    %132 = vector.extract_strided_slice %117 {offsets = [0, 192], sizes = [8, 64], strides = [1, 1]} : vector<8x256xf32> to vector<8x64xf32>
    %133 = arith.negf %132 : vector<8x64xf32>
    %134 = math.exp %133 : vector<8x64xf32>
    %cst_43 = arith.constant 1.000000e+00 : f32
    %135 = vector.broadcast %cst_43 : f32 to vector<8x64xf32>
    %136 = arith.addf %135, %134 : vector<8x64xf32>
    %137 = arith.divf %135, %136 : vector<8x64xf32>
    %138 = arith.mulf %129, %103 : vector<8x64xf32>
    %139 = arith.mulf %123, %131 : vector<8x64xf32>
    %140 = arith.addf %138, %139 : vector<8x64xf32>
    %141 = math.tanh %140 : vector<8x64xf32>
    %142 = arith.mulf %137, %141 : vector<8x64xf32>
    %143 = vector.extract_strided_slice %142 {offsets = [0, 0], sizes = [8, 32], strides = [1, 1]} : vector<8x64xf32> to vector<8x32xf32>
    %c3_44 = arith.constant 3 : index
    %c0_45 = arith.constant 0 : index
    %c0_46 = arith.constant 0 : index
    %144 = vector.load %arg9[%c3_44, %c0_45, %c0_46] : memref<8x8x32xf32, #tpu.memory_space<vmem>>, vector<1x8x32xf32>
    %145 = vector.shape_cast %144 : vector<1x8x32xf32> to vector<8x32xf32>
    %146 = vector.shape_cast %143 : vector<8x32xf32> to vector<1x8x32xf32>
    tpu.vector_store %arg9[%c3_44, %c0_45, %c0_46], %146 {strides = array<i32>} : memref<8x8x32xf32, #tpu.memory_space<vmem>>, vector<1x8x32xf32>,
    %147 = vector.extract_strided_slice %142 {offsets = [0, 32], sizes = [8, 32], strides = [1, 1]} : vector<8x64xf32> to vector<8x32xf32>
    %c4 = arith.constant 4 : index
    %c0_47 = arith.constant 0 : index
    %c0_48 = arith.constant 0 : index
    %148 = vector.load %arg10[%c4, %c0_47, %c0_48] : memref<8x8x32xf32, #tpu.memory_space<vmem>>, vector<1x8x32xf32>
    %149 = vector.shape_cast %148 : vector<1x8x32xf32> to vector<8x32xf32>
    %150 = vector.shape_cast %147 : vector<8x32xf32> to vector<1x8x32xf32>
    tpu.vector_store %arg10[%c4, %c0_47, %c0_48], %150 {strides = array<i32>} : memref<8x8x32xf32, #tpu.memory_space<vmem>>, vector<1x8x32xf32>,
    %c4_49 = arith.constant 4 : index
    %c0_50 = arith.constant 0 : index
    %c0_51 = arith.constant 0 : index
    %151 = vector.load %arg1[%c4_49, %c0_50, %c0_51] : memref<8x8x256xf32, #tpu.memory_space<vmem>>, vector<1x8x256xf32>
    %152 = vector.shape_cast %151 : vector<1x8x256xf32> to vector<8x256xf32>
    %cst_52 = arith.constant dense<0.000000e+00> : vector<8x256xf32>
    %153 = tpu.matmul %142, %0, %cst_52 {dimension_numbers = #tpu.dot_dimension_numbers<[1], [0], [0], [1], [0, 0, 1, 1], [], []>} : vector<8x64xf32>, vector<64x256xf32>, vector<8x256xf32> -> vector<8x256xf32>
    %154 = arith.addf %152, %153 : vector<8x256xf32>
    %155 = vector.extract_strided_slice %154 {offsets = [0, 0], sizes = [8, 64], strides = [1, 1]} : vector<8x256xf32> to vector<8x64xf32>
    %156 = arith.negf %155 : vector<8x64xf32>
    %157 = math.exp %156 : vector<8x64xf32>
    %cst_53 = arith.constant 1.000000e+00 : f32
    %158 = vector.broadcast %cst_53 : f32 to vector<8x64xf32>
    %159 = arith.addf %158, %157 : vector<8x64xf32>
    %160 = arith.divf %158, %159 : vector<8x64xf32>
    %161 = vector.extract_strided_slice %154 {offsets = [0, 64], sizes = [8, 64], strides = [1, 1]} : vector<8x256xf32> to vector<8x64xf32>
    %162 = arith.negf %161 : vector<8x64xf32>
    %163 = math.exp %162 : vector<8x64xf32>
    %cst_54 = arith.constant 1.000000e+00 : f32
    %164 = vector.broadcast %cst_54 : f32 to vector<8x64xf32>
    %165 = arith.addf %164, %163 : vector<8x64xf32>
    %166 = arith.divf %164, %165 : vector<8x64xf32>
    %167 = vector.extract_strided_slice %154 {offsets = [0, 128], sizes = [8, 64], strides = [1, 1]} : vector<8x256xf32> to vector<8x64xf32>
    %168 = math.tanh %167 : vector<8x64xf32>
    %169 = vector.extract_strided_slice %154 {offsets = [0, 192], sizes = [8, 64], strides = [1, 1]} : vector<8x256xf32> to vector<8x64xf32>
    %170 = arith.negf %169 : vector<8x64xf32>
    %171 = math.exp %170 : vector<8x64xf32>
    %cst_55 = arith.constant 1.000000e+00 : f32
    %172 = vector.broadcast %cst_55 : f32 to vector<8x64xf32>
    %173 = arith.addf %172, %171 : vector<8x64xf32>
    %174 = arith.divf %172, %173 : vector<8x64xf32>
    %175 = arith.mulf %166, %140 : vector<8x64xf32>
    %176 = arith.mulf %160, %168 : vector<8x64xf32>
    %177 = arith.addf %175, %176 : vector<8x64xf32>
    %178 = math.tanh %177 : vector<8x64xf32>
    %179 = arith.mulf %174, %178 : vector<8x64xf32>
    %180 = vector.extract_strided_slice %179 {offsets = [0, 0], sizes = [8, 32], strides = [1, 1]} : vector<8x64xf32> to vector<8x32xf32>
    %c4_56 = arith.constant 4 : index
    %c0_57 = arith.constant 0 : index
    %c0_58 = arith.constant 0 : index
    %181 = vector.load %arg9[%c4_56, %c0_57, %c0_58] : memref<8x8x32xf32, #tpu.memory_space<vmem>>, vector<1x8x32xf32>
    %182 = vector.shape_cast %181 : vector<1x8x32xf32> to vector<8x32xf32>
    %183 = vector.shape_cast %180 : vector<8x32xf32> to vector<1x8x32xf32>
    tpu.vector_store %arg9[%c4_56, %c0_57, %c0_58], %183 {strides = array<i32>} : memref<8x8x32xf32, #tpu.memory_space<vmem>>, vector<1x8x32xf32>,
    %184 = vector.extract_strided_slice %179 {offsets = [0, 32], sizes = [8, 32], strides = [1, 1]} : vector<8x64xf32> to vector<8x32xf32>
    %c3_59 = arith.constant 3 : index
    %c0_60 = arith.constant 0 : index
    %c0_61 = arith.constant 0 : index
    %185 = vector.load %arg10[%c3_59, %c0_60, %c0_61] : memref<8x8x32xf32, #tpu.memory_space<vmem>>, vector<1x8x32xf32>
    %186 = vector.shape_cast %185 : vector<1x8x32xf32> to vector<8x32xf32>
    %187 = vector.shape_cast %184 : vector<8x32xf32> to vector<1x8x32xf32>
    tpu.vector_store %arg10[%c3_59, %c0_60, %c0_61], %187 {strides = array<i32>} : memref<8x8x32xf32, #tpu.memory_space<vmem>>, vector<1x8x32xf32>,
    %c5_62 = arith.constant 5 : index
    %c0_63 = arith.constant 0 : index
    %c0_64 = arith.constant 0 : index
    %188 = vector.load %arg1[%c5_62, %c0_63, %c0_64] : memref<8x8x256xf32, #tpu.memory_space<vmem>>, vector<1x8x256xf32>
    %189 = vector.shape_cast %188 : vector<1x8x256xf32> to vector<8x256xf32>
    %cst_65 = arith.constant dense<0.000000e+00> : vector<8x256xf32>
    %190 = tpu.matmul %179, %0, %cst_65 {dimension_numbers = #tpu.dot_dimension_numbers<[1], [0], [0], [1], [0, 0, 1, 1], [], []>} : vector<8x64xf32>, vector<64x256xf32>, vector<8x256xf32> -> vector<8x256xf32>
    %191 = arith.addf %189, %190 : vector<8x256xf32>
    %192 = vector.extract_strided_slice %191 {offsets = [0, 0], sizes = [8, 64], strides = [1, 1]} : vector<8x256xf32> to vector<8x64xf32>
    %193 = arith.negf %192 : vector<8x64xf32>
    %194 = math.exp %193 : vector<8x64xf32>
    %cst_66 = arith.constant 1.000000e+00 : f32
    %195 = vector.broadcast %cst_66 : f32 to vector<8x64xf32>
    %196 = arith.addf %195, %194 : vector<8x64xf32>
    %197 = arith.divf %195, %196 : vector<8x64xf32>
    %198 = vector.extract_strided_slice %191 {offsets = [0, 64], sizes = [8, 64], strides = [1, 1]} : vector<8x256xf32> to vector<8x64xf32>
    %199 = arith.negf %198 : vector<8x64xf32>
    %200 = math.exp %199 : vector<8x64xf32>
    %cst_67 = arith.constant 1.000000e+00 : f32
    %201 = vector.broadcast %cst_67 : f32 to vector<8x64xf32>
    %202 = arith.addf %201, %200 : vector<8x64xf32>
    %203 = arith.divf %201, %202 : vector<8x64xf32>
    %204 = vector.extract_strided_slice %191 {offsets = [0, 128], sizes = [8, 64], strides = [1, 1]} : vector<8x256xf32> to vector<8x64xf32>
    %205 = math.tanh %204 : vector<8x64xf32>
    %206 = vector.extract_strided_slice %191 {offsets = [0, 192], sizes = [8, 64], strides = [1, 1]} : vector<8x256xf32> to vector<8x64xf32>
    %207 = arith.negf %206 : vector<8x64xf32>
    %208 = math.exp %207 : vector<8x64xf32>
    %cst_68 = arith.constant 1.000000e+00 : f32
    %209 = vector.broadcast %cst_68 : f32 to vector<8x64xf32>
    %210 = arith.addf %209, %208 : vector<8x64xf32>
    %211 = arith.divf %209, %210 : vector<8x64xf32>
    %212 = arith.mulf %203, %177 : vector<8x64xf32>
    %213 = arith.mulf %197, %205 : vector<8x64xf32>
    %214 = arith.addf %212, %213 : vector<8x64xf32>
    %215 = math.tanh %214 : vector<8x64xf32>
    %216 = arith.mulf %211, %215 : vector<8x64xf32>
    %217 = vector.extract_strided_slice %216 {offsets = [0, 0], sizes = [8, 32], strides = [1, 1]} : vector<8x64xf32> to vector<8x32xf32>
    %c5_69 = arith.constant 5 : index
    %c0_70 = arith.constant 0 : index
    %c0_71 = arith.constant 0 : index
    %218 = vector.load %arg9[%c5_69, %c0_70, %c0_71] : memref<8x8x32xf32, #tpu.memory_space<vmem>>, vector<1x8x32xf32>
    %219 = vector.shape_cast %218 : vector<1x8x32xf32> to vector<8x32xf32>
    %220 = vector.shape_cast %217 : vector<8x32xf32> to vector<1x8x32xf32>
    tpu.vector_store %arg9[%c5_69, %c0_70, %c0_71], %220 {strides = array<i32>} : memref<8x8x32xf32, #tpu.memory_space<vmem>>, vector<1x8x32xf32>,
    %221 = vector.extract_strided_slice %216 {offsets = [0, 32], sizes = [8, 32], strides = [1, 1]} : vector<8x64xf32> to vector<8x32xf32>
    %c2_72 = arith.constant 2 : index
    %c0_73 = arith.constant 0 : index
    %c0_74 = arith.constant 0 : index
    %222 = vector.load %arg10[%c2_72, %c0_73, %c0_74] : memref<8x8x32xf32, #tpu.memory_space<vmem>>, vector<1x8x32xf32>
    %223 = vector.shape_cast %222 : vector<1x8x32xf32> to vector<8x32xf32>
    %224 = vector.shape_cast %221 : vector<8x32xf32> to vector<1x8x32xf32>
    tpu.vector_store %arg10[%c2_72, %c0_73, %c0_74], %224 {strides = array<i32>} : memref<8x8x32xf32, #tpu.memory_space<vmem>>, vector<1x8x32xf32>,
    %c6_75 = arith.constant 6 : index
    %c0_76 = arith.constant 0 : index
    %c0_77 = arith.constant 0 : index
    %225 = vector.load %arg1[%c6_75, %c0_76, %c0_77] : memref<8x8x256xf32, #tpu.memory_space<vmem>>, vector<1x8x256xf32>
    %226 = vector.shape_cast %225 : vector<1x8x256xf32> to vector<8x256xf32>
    %cst_78 = arith.constant dense<0.000000e+00> : vector<8x256xf32>
    %227 = tpu.matmul %216, %0, %cst_78 {dimension_numbers = #tpu.dot_dimension_numbers<[1], [0], [0], [1], [0, 0, 1, 1], [], []>} : vector<8x64xf32>, vector<64x256xf32>, vector<8x256xf32> -> vector<8x256xf32>
    %228 = arith.addf %226, %227 : vector<8x256xf32>
    %229 = vector.extract_strided_slice %228 {offsets = [0, 0], sizes = [8, 64], strides = [1, 1]} : vector<8x256xf32> to vector<8x64xf32>
    %230 = arith.negf %229 : vector<8x64xf32>
    %231 = math.exp %230 : vector<8x64xf32>
    %cst_79 = arith.constant 1.000000e+00 : f32
    %232 = vector.broadcast %cst_79 : f32 to vector<8x64xf32>
    %233 = arith.addf %232, %231 : vector<8x64xf32>
    %234 = arith.divf %232, %233 : vector<8x64xf32>
    %235 = vector.extract_strided_slice %228 {offsets = [0, 64], sizes = [8, 64], strides = [1, 1]} : vector<8x256xf32> to vector<8x64xf32>
    %236 = arith.negf %235 : vector<8x64xf32>
    %237 = math.exp %236 : vector<8x64xf32>
    %cst_80 = arith.constant 1.000000e+00 : f32
    %238 = vector.broadcast %cst_80 : f32 to vector<8x64xf32>
    %239 = arith.addf %238, %237 : vector<8x64xf32>
    %240 = arith.divf %238, %239 : vector<8x64xf32>
    %241 = vector.extract_strided_slice %228 {offsets = [0, 128], sizes = [8, 64], strides = [1, 1]} : vector<8x256xf32> to vector<8x64xf32>
    %242 = math.tanh %241 : vector<8x64xf32>
    %243 = vector.extract_strided_slice %228 {offsets = [0, 192], sizes = [8, 64], strides = [1, 1]} : vector<8x256xf32> to vector<8x64xf32>
    %244 = arith.negf %243 : vector<8x64xf32>
    %245 = math.exp %244 : vector<8x64xf32>
    %cst_81 = arith.constant 1.000000e+00 : f32
    %246 = vector.broadcast %cst_81 : f32 to vector<8x64xf32>
    %247 = arith.addf %246, %245 : vector<8x64xf32>
    %248 = arith.divf %246, %247 : vector<8x64xf32>
    %249 = arith.mulf %240, %214 : vector<8x64xf32>
    %250 = arith.mulf %234, %242 : vector<8x64xf32>
    %251 = arith.addf %249, %250 : vector<8x64xf32>
    %252 = math.tanh %251 : vector<8x64xf32>
    %253 = arith.mulf %248, %252 : vector<8x64xf32>
    %254 = vector.extract_strided_slice %253 {offsets = [0, 0], sizes = [8, 32], strides = [1, 1]} : vector<8x64xf32> to vector<8x32xf32>
    %c6_82 = arith.constant 6 : index
    %c0_83 = arith.constant 0 : index
    %c0_84 = arith.constant 0 : index
    %255 = vector.load %arg9[%c6_82, %c0_83, %c0_84] : memref<8x8x32xf32, #tpu.memory_space<vmem>>, vector<1x8x32xf32>
    %256 = vector.shape_cast %255 : vector<1x8x32xf32> to vector<8x32xf32>
    %257 = vector.shape_cast %254 : vector<8x32xf32> to vector<1x8x32xf32>
    tpu.vector_store %arg9[%c6_82, %c0_83, %c0_84], %257 {strides = array<i32>} : memref<8x8x32xf32, #tpu.memory_space<vmem>>, vector<1x8x32xf32>,
    %258 = vector.extract_strided_slice %253 {offsets = [0, 32], sizes = [8, 32], strides = [1, 1]} : vector<8x64xf32> to vector<8x32xf32>
    %c1_85 = arith.constant 1 : index
    %c0_86 = arith.constant 0 : index
    %c0_87 = arith.constant 0 : index
    %259 = vector.load %arg10[%c1_85, %c0_86, %c0_87] : memref<8x8x32xf32, #tpu.memory_space<vmem>>, vector<1x8x32xf32>
    %260 = vector.shape_cast %259 : vector<1x8x32xf32> to vector<8x32xf32>
    %261 = vector.shape_cast %258 : vector<8x32xf32> to vector<1x8x32xf32>
    tpu.vector_store %arg10[%c1_85, %c0_86, %c0_87], %261 {strides = array<i32>} : memref<8x8x32xf32, #tpu.memory_space<vmem>>, vector<1x8x32xf32>,
    %c7_88 = arith.constant 7 : index
    %c0_89 = arith.constant 0 : index
    %c0_90 = arith.constant 0 : index
    %262 = vector.load %arg1[%c7_88, %c0_89, %c0_90] : memref<8x8x256xf32, #tpu.memory_space<vmem>>, vector<1x8x256xf32>
    %263 = vector.shape_cast %262 : vector<1x8x256xf32> to vector<8x256xf32>
    %cst_91 = arith.constant dense<0.000000e+00> : vector<8x256xf32>
    %264 = tpu.matmul %253, %0, %cst_91 {dimension_numbers = #tpu.dot_dimension_numbers<[1], [0], [0], [1], [0, 0, 1, 1], [], []>} : vector<8x64xf32>, vector<64x256xf32>, vector<8x256xf32> -> vector<8x256xf32>
    %265 = arith.addf %263, %264 : vector<8x256xf32>
    %266 = vector.extract_strided_slice %265 {offsets = [0, 0], sizes = [8, 64], strides = [1, 1]} : vector<8x256xf32> to vector<8x64xf32>
    %267 = arith.negf %266 : vector<8x64xf32>
    %268 = math.exp %267 : vector<8x64xf32>
    %cst_92 = arith.constant 1.000000e+00 : f32
    %269 = vector.broadcast %cst_92 : f32 to vector<8x64xf32>
    %270 = arith.addf %269, %268 : vector<8x64xf32>
    %271 = arith.divf %269, %270 : vector<8x64xf32>
    %272 = vector.extract_strided_slice %265 {offsets = [0, 64], sizes = [8, 64], strides = [1, 1]} : vector<8x256xf32> to vector<8x64xf32>
    %273 = arith.negf %272 : vector<8x64xf32>
    %274 = math.exp %273 : vector<8x64xf32>
    %cst_93 = arith.constant 1.000000e+00 : f32
    %275 = vector.broadcast %cst_93 : f32 to vector<8x64xf32>
    %276 = arith.addf %275, %274 : vector<8x64xf32>
    %277 = arith.divf %275, %276 : vector<8x64xf32>
    %278 = vector.extract_strided_slice %265 {offsets = [0, 128], sizes = [8, 64], strides = [1, 1]} : vector<8x256xf32> to vector<8x64xf32>
    %279 = math.tanh %278 : vector<8x64xf32>
    %280 = vector.extract_strided_slice %265 {offsets = [0, 192], sizes = [8, 64], strides = [1, 1]} : vector<8x256xf32> to vector<8x64xf32>
    %281 = arith.negf %280 : vector<8x64xf32>
    %282 = math.exp %281 : vector<8x64xf32>
    %cst_94 = arith.constant 1.000000e+00 : f32
    %283 = vector.broadcast %cst_94 : f32 to vector<8x64xf32>
    %284 = arith.addf %283, %282 : vector<8x64xf32>
    %285 = arith.divf %283, %284 : vector<8x64xf32>
    %286 = arith.mulf %277, %251 : vector<8x64xf32>
    %287 = arith.mulf %271, %279 : vector<8x64xf32>
    %288 = arith.addf %286, %287 : vector<8x64xf32>
    %289 = math.tanh %288 : vector<8x64xf32>
    %290 = arith.mulf %285, %289 : vector<8x64xf32>
    %291 = vector.extract_strided_slice %290 {offsets = [0, 0], sizes = [8, 32], strides = [1, 1]} : vector<8x64xf32> to vector<8x32xf32>
    %c7_95 = arith.constant 7 : index
    %c0_96 = arith.constant 0 : index
    %c0_97 = arith.constant 0 : index
    %292 = vector.load %arg9[%c7_95, %c0_96, %c0_97] : memref<8x8x32xf32, #tpu.memory_space<vmem>>, vector<1x8x32xf32>
    %293 = vector.shape_cast %292 : vector<1x8x32xf32> to vector<8x32xf32>
    %294 = vector.shape_cast %291 : vector<8x32xf32> to vector<1x8x32xf32>
    tpu.vector_store %arg9[%c7_95, %c0_96, %c0_97], %294 {strides = array<i32>} : memref<8x8x32xf32, #tpu.memory_space<vmem>>, vector<1x8x32xf32>,
    %295 = vector.extract_strided_slice %290 {offsets = [0, 32], sizes = [8, 32], strides = [1, 1]} : vector<8x64xf32> to vector<8x32xf32>
    %c0_98 = arith.constant 0 : index
    %c0_99 = arith.constant 0 : index
    %c0_100 = arith.constant 0 : index
    %296 = vector.load %arg10[%c0_98, %c0_99, %c0_100] : memref<8x8x32xf32, #tpu.memory_space<vmem>>, vector<1x8x32xf32>
    %297 = vector.shape_cast %296 : vector<1x8x32xf32> to vector<8x32xf32>
    %298 = vector.shape_cast %295 : vector<8x32xf32> to vector<1x8x32xf32>
    tpu.vector_store %arg10[%c0_98, %c0_99, %c0_100], %298 {strides = array<i32>} : memref<8x8x32xf32, #tpu.memory_space<vmem>>, vector<1x8x32xf32>,
    %c0_101 = arith.constant 0 : index
    %c0_102 = arith.constant 0 : index
    %c0_103 = arith.constant 0 : index
    %299 = vector.load %arg9[%c0_101, %c0_102, %c0_103] : memref<8x8x32xf32, #tpu.memory_space<vmem>>, vector<8x8x32xf32>
    %c0_104 = arith.constant 0 : index
    %c0_105 = arith.constant 0 : index
    %c0_106 = arith.constant 0 : index
    %300 = vector.load %arg10[%c0_104, %c0_105, %c0_106] : memref<8x8x32xf32, #tpu.memory_space<vmem>>, vector<8x8x32xf32>
    %301 = vector.extract_strided_slice %290 {offsets = [0, 0], sizes = [8, 32], strides = [1, 1]} : vector<8x64xf32> to vector<8x32xf32>
    %302 = vector.extract_strided_slice %290 {offsets = [0, 32], sizes = [8, 32], strides = [1, 1]} : vector<8x64xf32> to vector<8x32xf32>
    %303 = vector.shape_cast %301 : vector<8x32xf32> to vector<1x8x32xf32>
    %304 = vector.broadcast %303 : vector<1x8x32xf32> to vector<8x8x32xf32>
    %305 = arith.mulf %299, %304 : vector<8x8x32xf32>
    %cst_107 = arith.constant dense<0.000000e+00> : vector<8x8xf32>
    %306 = vector.multi_reduction <add>, %305, %cst_107 [2] : vector<8x8x32xf32> to vector<8x8xf32>
    %307 = vector.shape_cast %306 : vector<8x8xf32> to vector<8x8x1xf32>
    %308 = vector.shape_cast %302 : vector<8x32xf32> to vector<1x8x32xf32>
    %309 = vector.broadcast %308 : vector<1x8x32xf32> to vector<8x8x32xf32>
    %310 = arith.mulf %300, %309 : vector<8x8x32xf32>
    %cst_108 = arith.constant dense<0.000000e+00> : vector<8x8xf32>
    %311 = vector.multi_reduction <add>, %310, %cst_108 [2] : vector<8x8x32xf32> to vector<8x8xf32>
    %312 = vector.shape_cast %311 : vector<8x8xf32> to vector<8x8x1xf32>
    %313 = arith.addf %307, %312 : vector<8x8x1xf32>
    %cst_109 = arith.constant dense<0xFF800000> : vector<8x1xf32>
    %314 = vector.multi_reduction <maximumf>, %313, %cst_109 [0] : vector<8x8x1xf32> to vector<8x1xf32>
    %315 = vector.shape_cast %314 : vector<8x1xf32> to vector<1x8x1xf32>
    %316 = vector.broadcast %315 : vector<1x8x1xf32> to vector<8x8x1xf32>
    %317 = arith.subf %313, %316 : vector<8x8x1xf32>
    %318 = math.exp %317 : vector<8x8x1xf32>
    %cst_110 = arith.constant dense<0.000000e+00> : vector<8x1xf32>
    %319 = vector.multi_reduction <add>, %318, %cst_110 [0] : vector<8x8x1xf32> to vector<8x1xf32>
    %320 = vector.shape_cast %319 : vector<8x1xf32> to vector<1x8x1xf32>
    %321 = tpu.reciprocal %320 {approx = true} : vector<1x8x1xf32> -> vector<1x8x1xf32>
    %322 = vector.broadcast %321 : vector<1x8x1xf32> to vector<8x8x1xf32>
    %323 = arith.mulf %318, %322 : vector<8x8x1xf32>
    %324 = vector.broadcast %323 : vector<8x8x1xf32> to vector<8x8x32xf32>
    %325 = arith.mulf %299, %324 : vector<8x8x32xf32>
    %cst_111 = arith.constant dense<0.000000e+00> : vector<8x32xf32>
    %326 = vector.multi_reduction <add>, %325, %cst_111 [0] : vector<8x8x32xf32> to vector<8x32xf32>
    %327 = vector.broadcast %323 : vector<8x8x1xf32> to vector<8x8x32xf32>
    %328 = arith.mulf %300, %327 : vector<8x8x32xf32>
    %cst_112 = arith.constant dense<0.000000e+00> : vector<8x32xf32>
    %329 = vector.multi_reduction <add>, %328, %cst_112 [0] : vector<8x8x32xf32> to vector<8x32xf32>
    %c0_113 = arith.constant 0 : index
    %c0_114 = arith.constant 0 : index
    %330 = vector.load %arg5[%c0_113, %c0_114] : memref<32x128xf32, #tpu.memory_space<vmem>>, vector<32x128xf32>
    %cst_115 = arith.constant dense<0.000000e+00> : vector<8x128xf32>
    %331 = tpu.matmul %326, %330, %cst_115 {dimension_numbers = #tpu.dot_dimension_numbers<[1], [0], [0], [1], [0, 0, 1, 1], [], []>} : vector<8x32xf32>, vector<32x128xf32>, vector<8x128xf32> -> vector<8x128xf32>
    %c0_116 = arith.constant 0 : index
    %c0_117 = arith.constant 0 : index
    %332 = vector.load %arg6[%c0_116, %c0_117] : memref<32x128xf32, #tpu.memory_space<vmem>>, vector<32x128xf32>
    %cst_118 = arith.constant dense<0.000000e+00> : vector<8x128xf32>
    %333 = tpu.matmul %329, %332, %cst_118 {dimension_numbers = #tpu.dot_dimension_numbers<[1], [0], [0], [1], [0, 0, 1, 1], [], []>} : vector<8x32xf32>, vector<32x128xf32>, vector<8x128xf32> -> vector<8x128xf32>
    %334 = arith.addf %331, %333 : vector<8x128xf32>
    %c0_119 = arith.constant 0 : index
    %c0_120 = arith.constant 0 : index
    %335 = vector.load %arg7[%c0_119, %c0_120] : memref<1x128xf32, #tpu.memory_space<vmem>>, vector<1x128xf32>
    %336 = vector.broadcast %335 : vector<1x128xf32> to vector<8x128xf32>
    %337 = arith.addf %334, %336 : vector<8x128xf32>
    %c0_121 = arith.constant 0 : index
    %c0_122 = arith.constant 0 : index
    %338 = vector.load %arg8[%c0_121, %c0_122] : memref<8x128xf32, #tpu.memory_space<vmem>>, vector<8x128xf32>
    tpu.vector_store %arg8[%c0_121, %c0_122], %337 {strides = array<i32>} : memref<8x128xf32, #tpu.memory_space<vmem>>, vector<8x128xf32>,
    return
  }
  func.func @transform_0(%arg0: i32) -> (i32, i32, i32) {
    %c0_i32 = arith.constant 0 : i32
    %c0_i32_0 = arith.constant 0 : i32
    %c0_i32_1 = arith.constant 0 : i32
    return %c0_i32, %arg0, %c0_i32_0 : i32, i32, i32
  }
  func.func @transform_1(%arg0: i32) -> (i32, i32) {
    %c0_i32 = arith.constant 0 : i32
    %c0_i32_0 = arith.constant 0 : i32
    return %arg0, %c0_i32 : i32, i32
  }
  func.func @transform_2(%arg0: i32) -> (i32, i32) {
    %c0_i32 = arith.constant 0 : i32
    %c0_i32_0 = arith.constant 0 : i32
    return %arg0, %c0_i32 : i32, i32
  }
  func.func @transform_3(%arg0: i32) -> (i32, i32) {
    %c0_i32 = arith.constant 0 : i32
    %c0_i32_0 = arith.constant 0 : i32
    %c0_i32_1 = arith.constant 0 : i32
    return %c0_i32, %c0_i32_0 : i32, i32
  }
  func.func @transform_4(%arg0: i32) -> (i32, i32) {
    %c0_i32 = arith.constant 0 : i32
    %c0_i32_0 = arith.constant 0 : i32
    %c0_i32_1 = arith.constant 0 : i32
    return %c0_i32, %c0_i32_0 : i32, i32
  }
  func.func @transform_5(%arg0: i32) -> (i32, i32) {
    %c0_i32 = arith.constant 0 : i32
    %c0_i32_0 = arith.constant 0 : i32
    %c0_i32_1 = arith.constant 0 : i32
    return %c0_i32, %c0_i32_0 : i32, i32
  }
  func.func @transform_6(%arg0: i32) -> (i32, i32) {
    %c0_i32 = arith.constant 0 : i32
    %c0_i32_0 = arith.constant 0 : i32
    %c0_i32_1 = arith.constant 0 : i32
    return %c0_i32, %c0_i32_0 : i32, i32
  }
  func.func @transform_7(%arg0: i32) -> (i32, i32) {
    %c0_i32 = arith.constant 0 : i32
    %c0_i32_0 = arith.constant 0 : i32
    return %arg0, %c0_i32 : i32, i32
  }
}

</mosaic_0001>

<llo_original>
// kernel: tpu_custom_call.1
$region0: #{tpu_custom_call.1}
  #allocation0 [shape = 'u32[]', space=smem, size = 0x4, offset = 0x4, fixed_abs, tag = 'smem constant byte address 0x4 - core index']
  #allocation1 [shape = 'u32[144,128]{1,0:T(1,128)}', space=vmem, size = 0x12000, scoped, tag = 'internal scratch']
  #allocation2 [shape = 'f32[8,8,32]{2,1,0:T(8,128)}', space=vmem, size = 0x8000, scoped, tag = 'scratch operand']
  #allocation3 [shape = 'f32[8,8,32]{2,1,0:T(8,128)}', space=vmem, size = 0x8000, scoped, tag = 'scratch operand']
  %s0 = inlined_call_operand.hbm [shape: f32[8,8,256], index: 0, kind: input, shape index: {}]
  %s1 = inlined_call_operand.hbm [shape: f32[8,64], index: 1, kind: input, shape index: {}]
  %s2 = inlined_call_operand.hbm [shape: f32[8,64], index: 2, kind: input, shape index: {}]
  %s3 = inlined_call_operand.hbm [shape: f32[64,256], index: 3, kind: input, shape index: {}]
  %s4 = inlined_call_operand.hbm [shape: f32[32,128], index: 4, kind: input, shape index: {}]
  %s5 = inlined_call_operand.hbm [shape: f32[32,128], index: 5, kind: input, shape index: {}]
  %s6 = inlined_call_operand.vmem [shape: f32[1,128], index: 6, kind: input, shape index: {}]
  %s7 = inlined_call_operand.hbm [shape: f32[8,128], index: 7, kind: output, shape index: {}]
  %s8 = sld [smem:[#allocation0]]
  $region62: #{tpu_custom_call.1} parent=0
    _
  %s10 = ssub.s32 1, %s8
  %s11 = scalar_select 0, %s10, %s8
  $region1: #{tpu_custom_call.1} parent=0
    #allocation4 [shape = 'u8[65536]{0}', space=vmem, size = 0x10000, scoped, tag = 'input window, operand 0, single buffered']
    #allocation5 [shape = 's32[1]{0}', space=sflag, size = 0x4, scoped, tag = 'scoped memory for tpu_custom_call.1']
    #allocation6 [shape = 's32[1]{0}', space=sflag, size = 0x4, scoped, tag = 'scoped memory for tpu_custom_call.1']
    #allocation7 [shape = 'u8[4096]{0}', space=vmem, size = 0x1000, scoped, tag = 'input window, operand 1, single buffered']
    #allocation8 [shape = 's32[1]{0}', space=sflag, size = 0x4, scoped, tag = 'scoped memory for tpu_custom_call.1']
    #allocation9 [shape = 'u8[4096]{0}', space=vmem, size = 0x1000, scoped, tag = 'input window, operand 2, single buffered']
    #allocation10 [shape = 'u8[65536]{0}', space=vmem, size = 0x10000, scoped, tag = 'input window, operand 3, single buffered']
    #allocation11 [shape = 's32[1]{0}', space=sflag, size = 0x4, scoped, tag = 'scoped memory for tpu_custom_call.1']
    #allocation12 [shape = 'u8[16384]{0}', space=vmem, size = 0x4000, scoped, tag = 'input window, operand 4, single buffered']
    #allocation13 [shape = 'u8[16384]{0}', space=vmem, size = 0x4000, scoped, tag = 'input window, operand 5, single buffered']
    #allocation14 [shape = 's32[1]{0}', space=sflag, size = 0x4, scoped, tag = 'scoped memory for tpu_custom_call.1']
    #allocation15 [shape = 'u8[4096]{0}', space=vmem, size = 0x1000, scoped, tag = 'output window, operand 0, single buffered']
    %12 = vsyncpa [#allocation5], 0
    %13 = vsyncpa [#allocation8], 0
    %14 = vsyncpa [#allocation11], 0
    %15 = vsyncpa [#allocation14], 0
    %16 = vsyncpa [#allocation6], 0
    // Predicated region
    $region2: #{tpu_custom_call.1} parent=1 // pred_check
      _
    $region3: #{tpu_custom_call.1} parent=1 // pred_check_branch
      %18 = sbr.rel (0) target = $region5
    $region4: #{tpu_custom_call.1} parent=1 // pred_region
      %s20 = ssub.s32 2048, 2048
      %21 = vsyncadd [#allocation5], %s20
      %s22 = sshll.u32 [#allocation4], 4
      %s23 = int_to_ptr.vmem [resolvable:$true] %s22
      %28 = dma.hbm_to_vmem [thread:$0]  %s0, 2048, %s23, [#allocation5], 256, 256, 16
    $region5: #{tpu_custom_call.1} parent=1 // pred_fallthru
      _
    // Predicated region
    $region6: #{tpu_custom_call.1} parent=1 // pred_check
      _
    $region7: #{tpu_custom_call.1} parent=1 // pred_check_branch
      %30 = sbr.rel (0) target = $region9
    $region8: #{tpu_custom_call.1} parent=1 // pred_region
      %s32 = ssub.s32 128, 128
      %33 = vsyncadd [#allocation8], %s32
      %s35 = sshll.u32 [#allocation7], 4
      %s36 = int_to_ptr.vmem [resolvable:$true] %s35
      %38 = dma.hbm_to_vmem [thread:$0]  %s1, 128, %s36, [#allocation8]
    $region9: #{tpu_custom_call.1} parent=1 // pred_fallthru
      _
    // Predicated region
    $region10: #{tpu_custom_call.1} parent=1 // pred_check
      _
    $region11: #{tpu_custom_call.1} parent=1 // pred_check_branch
      %40 = sbr.rel (0) target = $region13
    $region12: #{tpu_custom_call.1} parent=1 // pred_region
      %s42 = ssub.s32 128, 128
      %43 = vsyncadd [#allocation8], %s42
      %s45 = sshll.u32 [#allocation9], 4
      %s46 = int_to_ptr.vmem [resolvable:$true] %s45
      %48 = dma.hbm_to_vmem [thread:$0]  %s2, 128, %s46, [#allocation8]
    $region13: #{tpu_custom_call.1} parent=1 // pred_fallthru
      _
    // Predicated region
    $region14: #{tpu_custom_call.1} parent=1 // pred_check
      _
    $region15: #{tpu_custom_call.1} parent=1 // pred_check_branch
      %50 = sbr.rel (0) target = $region17
    $region16: #{tpu_custom_call.1} parent=1 // pred_region
      %s52 = ssub.s32 2048, 2048
      %53 = vsyncadd [#allocation11], %s52
      %s54 = sshll.u32 [#allocation10], 4
      %s55 = int_to_ptr.vmem [resolvable:$true] %s54
      %60 = dma.hbm_to_vmem [thread:$0]  %s3, 2048, %s55, [#allocation11], 256, 256, 16
    $region17: #{tpu_custom_call.1} parent=1 // pred_fallthru
      _
    // Predicated region
    $region18: #{tpu_custom_call.1} parent=1 // pred_check
      _
    $region19: #{tpu_custom_call.1} parent=1 // pred_check_branch
      %62 = sbr.rel (0) target = $region21
    $region20: #{tpu_custom_call.1} parent=1 // pred_region
      %s64 = ssub.s32 512, 512
      %65 = vsyncadd [#allocation11], %s64
      %s66 = sshll.u32 [#allocation12], 4
      %s67 = int_to_ptr.vmem [resolvable:$true] %s66
      %72 = dma.hbm_to_vmem [thread:$0]  %s4, 512, %s67, [#allocation11], 128, 128, 8
    $region21: #{tpu_custom_call.1} parent=1 // pred_fallthru
      _
    // Predicated region
    $region22: #{tpu_custom_call.1} parent=1 // pred_check
      _
    $region23: #{tpu_custom_call.1} parent=1 // pred_check_branch
      %74 = sbr.rel (0) target = $region25
    $region24: #{tpu_custom_call.1} parent=1 // pred_region
      %s76 = ssub.s32 512, 512
      %77 = vsyncadd [#allocation14], %s76
      %s78 = sshll.u32 [#allocation13], 4
      %s79 = int_to_ptr.vmem [resolvable:$true] %s78
      %84 = dma.hbm_to_vmem [thread:$0]  %s5, 512, %s79, [#allocation14], 128, 128, 8
    $region25: #{tpu_custom_call.1} parent=1 // pred_fallthru
      _
    // Predicated region
    $region26: #{tpu_custom_call.1} parent=1 // pred_check
      _
    $region27: #{tpu_custom_call.1} parent=1 // pred_check_branch
      %86 = sbr.rel (0) target = $region29
    $region28: #{tpu_custom_call.1} parent=1 // pred_region
      _
    $region29: #{tpu_custom_call.1} parent=1 // pred_fallthru
      _
    // Predicated region
    $region30: #{tpu_custom_call.1} parent=1 // pred_check
      _
    $region31: #{tpu_custom_call.1} parent=1 // pred_check_branch
      %88 = sbr.rel (0) target = $region33
    $region32: #{tpu_custom_call.1} parent=1 // pred_region
      %89 = dma.done [#allocation5], 2048
    $region33: #{tpu_custom_call.1} parent=1 // pred_fallthru
      _
    // Predicated region
    $region34: #{tpu_custom_call.1} parent=1 // pred_check
      _
    $region35: #{tpu_custom_call.1} parent=1 // pred_check_branch
      %91 = sbr.rel (0) target = $region37
    $region36: #{tpu_custom_call.1} parent=1 // pred_region
      %92 = dma.done [#allocation8], 128
    $region37: #{tpu_custom_call.1} parent=1 // pred_fallthru
      _
    // Predicated region
    $region38: #{tpu_custom_call.1} parent=1 // pred_check
      _
    $region39: #{tpu_custom_call.1} parent=1 // pred_check_branch
      %94 = sbr.rel (0) target = $region41
    $region40: #{tpu_custom_call.1} parent=1 // pred_region
      %95 = dma.done [#allocation8], 128
    $region41: #{tpu_custom_call.1} parent=1 // pred_fallthru
      _
    // Predicated region
    $region42: #{tpu_custom_call.1} parent=1 // pred_check
      _
    $region43: #{tpu_custom_call.1} parent=1 // pred_check_branch
      %97 = sbr.rel (0) target = $region45
    $region44: #{tpu_custom_call.1} parent=1 // pred_region
      %98 = dma.done [#allocation11], 2048
    $region45: #{tpu_custom_call.1} parent=1 // pred_fallthru
      _
    // Predicated region
    $region46: #{tpu_custom_call.1} parent=1 // pred_check
      _
    $region47: #{tpu_custom_call.1} parent=1 // pred_check_branch
      %100 = sbr.rel (0) target = $region49
    $region48: #{tpu_custom_call.1} parent=1 // pred_region
      %101 = dma.done [#allocation11], 512
    $region49: #{tpu_custom_call.1} parent=1 // pred_fallthru
      _
    // Predicated region
    $region50: #{tpu_custom_call.1} parent=1 // pred_check
      _
    $region51: #{tpu_custom_call.1} parent=1 // pred_check_branch
      %103 = sbr.rel (0) target = $region53
    $region52: #{tpu_custom_call.1} parent=1 // pred_region
      %104 = dma.done [#allocation14], 512
    $region53: #{tpu_custom_call.1} parent=1 // pred_fallthru
      _
    %v105 = vld [vmem:[#allocation10] sm:$0xff]
    %v106 = vld [vmem:[#allocation10 + $0x8] sm:$0xff]
    %v107 = vld [vmem:[#allocation10 + $0x10] sm:$0xff]
    %v108 = vld [vmem:[#allocation10 + $0x18] sm:$0xff]
    %v109 = vld [vmem:[#allocation10 + $0x20] sm:$0xff]
    %v110 = vld [vmem:[#allocation10 + $0x28] sm:$0xff]
    %v111 = vld [vmem:[#allocation10 + $0x30] sm:$0xff]
    %v112 = vld [vmem:[#allocation10 + $0x38] sm:$0xff]
    %v113 = vld [vmem:[#allocation10 + $0x40] sm:$0xff]
    %v114 = vld [vmem:[#allocation10 + $0x48] sm:$0xff]
    %v115 = vld [vmem:[#allocation10 + $0x50] sm:$0xff]
    %v116 = vld [vmem:[#allocation10 + $0x58] sm:$0xff]
    %v117 = vld [vmem:[#allocation10 + $0x60] sm:$0xff]
    %v118 = vld [vmem:[#allocation10 + $0x68] sm:$0xff]
    %v119 = vld [vmem:[#allocation10 + $0x70] sm:$0xff]
    %v120 = vld [vmem:[#allocation10 + $0x78] sm:$0xff]
    %v121 = vld [vmem:[#allocation7] sm:$0xff]
    %v122 = vld [vmem:[#allocation9] sm:$0xff]
    %v123 = vld [vmem:[#allocation4] sm:$0xff]
    %v124 = vld [vmem:[#allocation4 + $0x8] sm:$0xff]
    %vm125 = vcmask 523264
    %v127 = vsel %vm125, %v121, 0
    %129 = vmatprep.subr.mxu0 %v106
    %130 = vmatpush1.msra.mxu0 %v105
    %131 = vmatprep.subr.mxu0 %v108
    %132 = vmatpush1.msra.mxu0 %v107
    %133 = vmatprep.subr.mxu0 %v110
    %134 = vmatpush1.msra.mxu0 %v109
    %135 = vmatprep.subr.mxu0 %v112
    %136 = vmatpush1.msra.mxu0 %v111
    %137 = vmatprep.subr.mxu0 %v114
    %138 = vmatpush1.msra.mxu0 %v113
    %139 = vmatprep.subr.mxu0 %v116
    %140 = vmatpush1.msra.mxu0 %v115
    %141 = vmatprep.subr.mxu0 %v118
    %142 = vmatpush1.msra.mxu0 %v117
    %143 = vmatprep.subr.mxu0 %v120
    %144 = vmatpush1.msra.mxu0 %v119
    %145 = vmatprep.subr.mxu0 0.0
    %146 = vmatpush1.msra.mxu0 0.0
    %147 = vmatprep.subr.mxu0 0.0
    %148 = vmatpush1.msra.mxu0 0.0
    %149 = vmatprep.subr.mxu0 0.0
    %150 = vmatpush1.msra.mxu0 0.0
    %151 = vmatprep.subr.mxu0 0.0
    %152 = vmatpush1.msra.mxu0 0.0
    %153 = vmatprep.subr.mxu0 0.0
    %154 = vmatpush1.msra.mxu0 0.0
    %155 = vmatprep.subr.mxu0 0.0
    %156 = vmatpush1.msra.mxu0 0.0
    %157 = vmatprep.subr.mxu0 0.0
    %158 = vmatpush1.msra.mxu0 0.0
    %159 = vmatprep.subr.mxu0 0.0
    %160 = vmatpush1.msra.mxu0 0.0
    %161 = vmatprep.subr.mxu0 0.0
    %162 = vmatpush1.msra.mxu0 0.0
    %163 = vmatprep.subr.mxu0 0.0
    %164 = vmatpush1.msra.mxu0 0.0
    %165 = vmatprep.subr.mxu0 0.0
    %166 = vmatpush1.msra.mxu0 0.0
    %167 = vmatprep.subr.mxu0 0.0
    %168 = vmatpush1.msra.mxu0 0.0
    %169 = vmatprep.subr.mxu0 0.0
    %170 = vmatpush1.msra.mxu0 0.0
    %171 = vmatprep.subr.mxu0 0.0
    %172 = vmatpush1.msra.mxu0 0.0
    %173 = vmatprep.subr.mxu0 0.0
    %174 = vmatpush1.msra.mxu0 0.0
    %175 = vmatprep.subr.mxu0 0.0
    %176 = vmatpush1.msra.mxu0 0.0
    %177 = vmatprep.subr.mxu0 0.0
    %178 = vmatpush1.msra.mxu0 0.0
    %179 = vmatprep.subr.mxu0 0.0
    %180 = vmatpush1.msra.mxu0 0.0
    %181 = vmatprep.subr.mxu0 0.0
    %182 = vmatpush1.msra.mxu0 0.0
    %183 = vmatprep.subr.mxu0 0.0
    %184 = vmatpush1.msra.mxu0 0.0
    %185 = vmatprep.subr.mxu0 0.0
    %186 = vmatpush1.msra.mxu0 0.0
    %187 = vmatprep.subr.mxu0 0.0
    %188 = vmatpush1.msra.mxu0 0.0
    %189 = vmatprep.subr.mxu0 0.0
    %190 = vmatpush1.msra.mxu0 0.0
    %191 = vmatprep.subr.mxu0 0.0
    %192 = vmatpush1.msra.mxu0 0.0
    %193 = vmatprep.mubr.f32.mxu0 0.0
    %194 = vmatmul.mubr.f32.gmra.mrb[0].mxu0 %v127
    %v195 = vpop.f32.mrb[0].mxu0
    %v196 = vadd.f32 0.0, %v195
    %v197 = vpop.f32.mrb[0].mxu0
    %v198 = vadd.f32 0.0, %v197
    %199 = vdwg.mxu0
    %v200 = vadd.f32 %v123, %v196
    %v201 = vadd.f32 %v124, %v198
    %v202 = vxor.u32 %v200, 2147483648
    %v203 = vmul.f32 %v202, 1.442695
    %v204 = vpow.pop %v203
    %v205 = vadd.f32 %v204, 1.0
    %v206 = vrcp.pop %v205
    %v207 = vmul.f32 1.0, %v206
    %v208 = vtanh.pop %v201
    %v209 = vxor.u32 %v201, 2147483648
    %v210 = vmul.f32 %v209, 1.442695
    %v211 = vpow.pop %v210
    %v212 = vadd.f32 %v211, 1.0
    %v213 = vrcp.pop %v212
    %v214 = vmul.f32 1.0, %v213
    %216 = vrot.lane.b32.xlu0 %v122, 64
    %v217 = vpop.permute.xlu0 %216
    %v219 = vmul.f32 %v207, %v217
    %v220 = vmul.f32 %v207, %v208
    %222 = vrot.lane.b32.xlu0 %v220, 64
    %v223 = vpop.permute.xlu0 %222
    %v225 = vadd.f32 %v219, %v223
    %v226 = vtanh.pop %v225
    %v227 = vmul.f32 %v214, %v226
    %229 = vrot.lane.b32.xlu0 %v227, 64
    %v230 = vpop.permute.xlu0 %229
    %vm232 = vcmask 261120
    %233 = vst.msk [vmem:[#allocation2] sm:$0xff] %vm232, %v230
    %234 = vrot.lane.b32.xlu0 %v227, 32
    %v235 = vpop.permute.xlu0 %234
    %s237 = scalar_lea.vmem [#allocation3], 56
    %238 = vst.msk [vmem:[%s237] sm:$0xff] %vm232, %v235
    %s239 = scalar_lea.vmem [#allocation4], 16
    %v240 = vld [vmem:[%s239] sm:$0xff]
    %v241 = vld [vmem:[%s239 + $0x8] sm:$0xff]
    %v242 = vsel %vm125, %v230, 0
    %244 = vmatprep.subr.mxu0 %v106
    %245 = vmatpush1.msra.mxu0 %v105
    %246 = vmatprep.subr.mxu0 %v108
    %247 = vmatpush1.msra.mxu0 %v107
    %248 = vmatprep.subr.mxu0 %v110
    %249 = vmatpush1.msra.mxu0 %v109
    %250 = vmatprep.subr.mxu0 %v112
    %251 = vmatpush1.msra.mxu0 %v111
    %252 = vmatprep.subr.mxu0 %v114
    %253 = vmatpush1.msra.mxu0 %v113
    %254 = vmatprep.subr.mxu0 %v116
    %255 = vmatpush1.msra.mxu0 %v115
    %256 = vmatprep.subr.mxu0 %v118
    %257 = vmatpush1.msra.mxu0 %v117
    %258 = vmatprep.subr.mxu0 %v120
    %259 = vmatpush1.msra.mxu0 %v119
    %260 = vmatprep.subr.mxu0 0.0
    %261 = vmatpush1.msra.mxu0 0.0
    %262 = vmatprep.subr.mxu0 0.0
    %263 = vmatpush1.msra.mxu0 0.0
    %264 = vmatprep.subr.mxu0 0.0
    %265 = vmatpush1.msra.mxu0 0.0
    %266 = vmatprep.subr.mxu0 0.0
    %267 = vmatpush1.msra.mxu0 0.0
    %268 = vmatprep.subr.mxu0 0.0
    %269 = vmatpush1.msra.mxu0 0.0
    %270 = vmatprep.subr.mxu0 0.0
    %271 = vmatpush1.msra.mxu0 0.0
    %272 = vmatprep.subr.mxu0 0.0
    %273 = vmatpush1.msra.mxu0 0.0
    %274 = vmatprep.subr.mxu0 0.0
    %275 = vmatpush1.msra.mxu0 0.0
    %276 = vmatprep.subr.mxu0 0.0
    %277 = vmatpush1.msra.mxu0 0.0
    %278 = vmatprep.subr.mxu0 0.0
    %279 = vmatpush1.msra.mxu0 0.0
    %280 = vmatprep.subr.mxu0 0.0
    %281 = vmatpush1.msra.mxu0 0.0
    %282 = vmatprep.subr.mxu0 0.0
    %283 = vmatpush1.msra.mxu0 0.0
    %284 = vmatprep.subr.mxu0 0.0
    %285 = vmatpush1.msra.mxu0 0.0
    %286 = vmatprep.subr.mxu0 0.0
    %287 = vmatpush1.msra.mxu0 0.0
    %288 = vmatprep.subr.mxu0 0.0
    %289 = vmatpush1.msra.mxu0 0.0
    %290 = vmatprep.subr.mxu0 0.0
    %291 = vmatpush1.msra.mxu0 0.0
    %292 = vmatprep.subr.mxu0 0.0
    %293 = vmatpush1.msra.mxu0 0.0
    %294 = vmatprep.subr.mxu0 0.0
    %295 = vmatpush1.msra.mxu0 0.0
    %296 = vmatprep.subr.mxu0 0.0
    %297 = vmatpush1.msra.mxu0 0.0
    %298 = vmatprep.subr.mxu0 0.0
    %299 = vmatpush1.msra.mxu0 0.0
    %300 = vmatprep.subr.mxu0 0.0
    %301 = vmatpush1.msra.mxu0 0.0
    %302 = vmatprep.subr.mxu0 0.0
    %303 = vmatpush1.msra.mxu0 0.0
    %304 = vmatprep.subr.mxu0 0.0
    %305 = vmatpush1.msra.mxu0 0.0
    %306 = vmatprep.subr.mxu0 0.0
    %307 = vmatpush1.msra.mxu0 0.0
    %308 = vmatprep.mubr.f32.mxu0 0.0
    %309 = vmatmul.mubr.f32.gmra.mrb[0].mxu0 %v242
    %v310 = vpop.f32.mrb[0].mxu0
    %v311 = vadd.f32 0.0, %v310
    %v312 = vpop.f32.mrb[0].mxu0
    %v313 = vadd.f32 0.0, %v312
    %314 = vdwg.mxu0
    %v315 = vadd.f32 %v240, %v311
    %v316 = vadd.f32 %v241, %v313
    %v317 = vxor.u32 %v315, 2147483648
    %v318 = vmul.f32 %v317, 1.442695
    %v319 = vpow.pop %v318
    %v320 = vadd.f32 %v319, 1.0
    %v321 = vrcp.pop %v320
    %v322 = vmul.f32 1.0, %v321
    %v323 = vtanh.pop %v316
    %v324 = vxor.u32 %v316, 2147483648
    %v325 = vmul.f32 %v324, 1.442695
    %v326 = vpow.pop %v325
    %v327 = vadd.f32 %v326, 1.0
    %v328 = vrcp.pop %v327
    %v329 = vmul.f32 1.0, %v328
    %v330 = vmul.f32 %v322, %v225
    %v331 = vmul.f32 %v322, %v323
    %333 = vrot.lane.b32.xlu0 %v331, 64
    %v334 = vpop.permute.xlu0 %333
    %v336 = vadd.f32 %v330, %v334
    %v337 = vtanh.pop %v336
    %v338 = vmul.f32 %v329, %v337
    %340 = vrot.lane.b32.xlu0 %v338, 64
    %v341 = vpop.permute.xlu0 %340
    %s343 = scalar_lea.vmem [#allocation2], 8
    %344 = vst.msk [vmem:[%s343] sm:$0xff] %vm232, %v341
    %345 = vrot.lane.b32.xlu0 %v338, 32
    %v346 = vpop.permute.xlu0 %345
    %s348 = scalar_lea.vmem [#allocation3], 48
    %349 = vst.msk [vmem:[%s348] sm:$0xff] %vm232, %v346
    %s350 = scalar_lea.vmem [#allocation4], 32
    %v351 = vld [vmem:[%s350] sm:$0xff]
    %v352 = vld [vmem:[%s350 + $0x8] sm:$0xff]
    %v353 = vsel %vm125, %v341, 0
    %355 = vmatprep.subr.mxu0 %v106
    %356 = vmatpush1.msra.mxu0 %v105
    %357 = vmatprep.subr.mxu0 %v108
    %358 = vmatpush1.msra.mxu0 %v107
    %359 = vmatprep.subr.mxu0 %v110
    %360 = vmatpush1.msra.mxu0 %v109
    %361 = vmatprep.subr.mxu0 %v112
    %362 = vmatpush1.msra.mxu0 %v111
    %363 = vmatprep.subr.mxu0 %v114
    %364 = vmatpush1.msra.mxu0 %v113
    %365 = vmatprep.subr.mxu0 %v116
    %366 = vmatpush1.msra.mxu0 %v115
    %367 = vmatprep.subr.mxu0 %v118
    %368 = vmatpush1.msra.mxu0 %v117
    %369 = vmatprep.subr.mxu0 %v120
    %370 = vmatpush1.msra.mxu0 %v119
    %371 = vmatprep.subr.mxu0 0.0
    %372 = vmatpush1.msra.mxu0 0.0
    %373 = vmatprep.subr.mxu0 0.0
    %374 = vmatpush1.msra.mxu0 0.0
    %375 = vmatprep.subr.mxu0 0.0
    %376 = vmatpush1.msra.mxu0 0.0
    %377 = vmatprep.subr.mxu0 0.0
    %378 = vmatpush1.msra.mxu0 0.0
    %379 = vmatprep.subr.mxu0 0.0
    %380 = vmatpush1.msra.mxu0 0.0
    %381 = vmatprep.subr.mxu0 0.0
    %382 = vmatpush1.msra.mxu0 0.0
    %383 = vmatprep.subr.mxu0 0.0
    %384 = vmatpush1.msra.mxu0 0.0
    %385 = vmatprep.subr.mxu0 0.0
    %386 = vmatpush1.msra.mxu0 0.0
    %387 = vmatprep.subr.mxu0 0.0
    %388 = vmatpush1.msra.mxu0 0.0
    %389 = vmatprep.subr.mxu0 0.0
    %390 = vmatpush1.msra.mxu0 0.0
    %391 = vmatprep.subr.mxu0 0.0
    %392 = vmatpush1.msra.mxu0 0.0
    %393 = vmatprep.subr.mxu0 0.0
    %394 = vmatpush1.msra.mxu0 0.0
    %395 = vmatprep.subr.mxu0 0.0
    %396 = vmatpush1.msra.mxu0 0.0
    %397 = vmatprep.subr.mxu0 0.0
    %398 = vmatpush1.msra.mxu0 0.0
    %399 = vmatprep.subr.mxu0 0.0
    %400 = vmatpush1.msra.mxu0 0.0
    %401 = vmatprep.subr.mxu0 0.0
    %402 = vmatpush1.msra.mxu0 0.0
    %403 = vmatprep.subr.mxu0 0.0
    %404 = vmatpush1.msra.mxu0 0.0
    %405 = vmatprep.subr.mxu0 0.0
    %406 = vmatpush1.msra.mxu0 0.0
    %407 = vmatprep.subr.mxu0 0.0
    %408 = vmatpush1.msra.mxu0 0.0
    %409 = vmatprep.subr.mxu0 0.0
    %410 = vmatpush1.msra.mxu0 0.0
    %411 = vmatprep.subr.mxu0 0.0
    %412 = vmatpush1.msra.mxu0 0.0
    %413 = vmatprep.subr.mxu0 0.0
    %414 = vmatpush1.msra.mxu0 0.0
    %415 = vmatprep.subr.mxu0 0.0
    %416 = vmatpush1.msra.mxu0 0.0
    %417 = vmatprep.subr.mxu0 0.0
    %418 = vmatpush1.msra.mxu0 0.0
    %419 = vmatprep.mubr.f32.mxu0 0.0
    %420 = vmatmul.mubr.f32.gmra.mrb[0].mxu0 %v353
    %v421 = vpop.f32.mrb[0].mxu0
    %v422 = vadd.f32 0.0, %v421
    %v423 = vpop.f32.mrb[0].mxu0
    %v424 = vadd.f32 0.0, %v423
    %425 = vdwg.mxu0
    %v426 = vadd.f32 %v351, %v422
    %v427 = vadd.f32 %v352, %v424
    %v428 = vxor.u32 %v426, 2147483648
    %v429 = vmul.f32 %v428, 1.442695
    %v430 = vpow.pop %v429
    %v431 = vadd.f32 %v430, 1.0
    %v432 = vrcp.pop %v431
    %v433 = vmul.f32 1.0, %v432
    %v434 = vtanh.pop %v427
    %v435 = vxor.u32 %v427, 2147483648
    %v436 = vmul.f32 %v435, 1.442695
    %v437 = vpow.pop %v436
    %v438 = vadd.f32 %v437, 1.0
    %v439 = vrcp.pop %v438
    %v440 = vmul.f32 1.0, %v439
    %v441 = vmul.f32 %v433, %v336
    %v442 = vmul.f32 %v433, %v434
    %444 = vrot.lane.b32.xlu0 %v442, 64
    %v445 = vpop.permute.xlu0 %444
    %v447 = vadd.f32 %v441, %v445
    %v448 = vtanh.pop %v447
    %v449 = vmul.f32 %v440, %v448
    %451 = vrot.lane.b32.xlu0 %v449, 64
    %v452 = vpop.permute.xlu0 %451
    %s454 = scalar_lea.vmem [#allocation2], 16
    %455 = vst.msk [vmem:[%s454] sm:$0xff] %vm232, %v452
    %456 = vrot.lane.b32.xlu0 %v449, 32
    %v457 = vpop.permute.xlu0 %456
    %s459 = scalar_lea.vmem [#allocation3], 40
    %460 = vst.msk [vmem:[%s459] sm:$0xff] %vm232, %v457
    %s461 = scalar_lea.vmem [#allocation4], 48
    %v462 = vld [vmem:[%s461] sm:$0xff]
    %v463 = vld [vmem:[%s461 + $0x8] sm:$0xff]
    %v464 = vsel %vm125, %v452, 0
    %466 = vmatprep.subr.mxu0 %v106
    %467 = vmatpush1.msra.mxu0 %v105
    %468 = vmatprep.subr.mxu0 %v108
    %469 = vmatpush1.msra.mxu0 %v107
    %470 = vmatprep.subr.mxu0 %v110
    %471 = vmatpush1.msra.mxu0 %v109
    %472 = vmatprep.subr.mxu0 %v112
    %473 = vmatpush1.msra.mxu0 %v111
    %474 = vmatprep.subr.mxu0 %v114
    %475 = vmatpush1.msra.mxu0 %v113
    %476 = vmatprep.subr.mxu0 %v116
    %477 = vmatpush1.msra.mxu0 %v115
    %478 = vmatprep.subr.mxu0 %v118
    %479 = vmatpush1.msra.mxu0 %v117
    %480 = vmatprep.subr.mxu0 %v120
    %481 = vmatpush1.msra.mxu0 %v119
    %482 = vmatprep.subr.mxu0 0.0
    %483 = vmatpush1.msra.mxu0 0.0
    %484 = vmatprep.subr.mxu0 0.0
    %485 = vmatpush1.msra.mxu0 0.0
    %486 = vmatprep.subr.mxu0 0.0
    %487 = vmatpush1.msra.mxu0 0.0
    %488 = vmatprep.subr.mxu0 0.0
    %489 = vmatpush1.msra.mxu0 0.0
    %490 = vmatprep.subr.mxu0 0.0
    %491 = vmatpush1.msra.mxu0 0.0
    %492 = vmatprep.subr.mxu0 0.0
    %493 = vmatpush1.msra.mxu0 0.0
    %494 = vmatprep.subr.mxu0 0.0
    %495 = vmatpush1.msra.mxu0 0.0
    %496 = vmatprep.subr.mxu0 0.0
    %497 = vmatpush1.msra.mxu0 0.0
    %498 = vmatprep.subr.mxu0 0.0
    %499 = vmatpush1.msra.mxu0 0.0
    %500 = vmatprep.subr.mxu0 0.0
    %501 = vmatpush1.msra.mxu0 0.0
    %502 = vmatprep.subr.mxu0 0.0
    %503 = vmatpush1.msra.mxu0 0.0
    %504 = vmatprep.subr.mxu0 0.0
    %505 = vmatpush1.msra.mxu0 0.0
    %506 = vmatprep.subr.mxu0 0.0
    %507 = vmatpush1.msra.mxu0 0.0
    %508 = vmatprep.subr.mxu0 0.0
    %509 = vmatpush1.msra.mxu0 0.0
    %510 = vmatprep.subr.mxu0 0.0
    %511 = vmatpush1.msra.mxu0 0.0
    %512 = vmatprep.subr.mxu0 0.0
    %513 = vmatpush1.msra.mxu0 0.0
    %514 = vmatprep.subr.mxu0 0.0
    %515 = vmatpush1.msra.mxu0 0.0
    %516 = vmatprep.subr.mxu0 0.0
    %517 = vmatpush1.msra.mxu0 0.0
    %518 = vmatprep.subr.mxu0 0.0
    %519 = vmatpush1.msra.mxu0 0.0
    %520 = vmatprep.subr.mxu0 0.0
    %521 = vmatpush1.msra.mxu0 0.0
    %522 = vmatprep.subr.mxu0 0.0
    %523 = vmatpush1.msra.mxu0 0.0
    %524 = vmatprep.subr.mxu0 0.0
    %525 = vmatpush1.msra.mxu0 0.0
    %526 = vmatprep.subr.mxu0 0.0
    %527 = vmatpush1.msra.mxu0 0.0
    %528 = vmatprep.subr.mxu0 0.0
    %529 = vmatpush1.msra.mxu0 0.0
    %530 = vmatprep.mubr.f32.mxu0 0.0
    %531 = vmatmul.mubr.f32.gmra.mrb[0].mxu0 %v464
    %v532 = vpop.f32.mrb[0].mxu0
    %v533 = vadd.f32 0.0, %v532
    %v534 = vpop.f32.mrb[0].mxu0
    %v535 = vadd.f32 0.0, %v534
    %536 = vdwg.mxu0
    %v537 = vadd.f32 %v462, %v533
    %v538 = vadd.f32 %v463, %v535
    %v539 = vxor.u32 %v537, 2147483648
    %v540 = vmul.f32 %v539, 1.442695
    %v541 = vpow.pop %v540
    %v542 = vadd.f32 %v541, 1.0
    %v543 = vrcp.pop %v542
    %v544 = vmul.f32 1.0, %v543
    %v545 = vtanh.pop %v538
    %v546 = vxor.u32 %v538, 2147483648
    %v547 = vmul.f32 %v546, 1.442695
    %v548 = vpow.pop %v547
    %v549 = vadd.f32 %v548, 1.0
    %v550 = vrcp.pop %v549
    %v551 = vmul.f32 1.0, %v550
    %v552 = vmul.f32 %v544, %v447
    %v553 = vmul.f32 %v544, %v545
    %555 = vrot.lane.b32.xlu0 %v553, 64
    %v556 = vpop.permute.xlu0 %555
    %v558 = vadd.f32 %v552, %v556
    %v559 = vtanh.pop %v558
    %v560 = vmul.f32 %v551, %v559
    %562 = vrot.lane.b32.xlu0 %v560, 64
    %v563 = vpop.permute.xlu0 %562
    %s565 = scalar_lea.vmem [#allocation2], 24
    %566 = vst.msk [vmem:[%s565] sm:$0xff] %vm232, %v563
    %567 = vrot.lane.b32.xlu0 %v560, 32
    %v568 = vpop.permute.xlu0 %567
    %s570 = scalar_lea.vmem [#allocation3], 32
    %571 = vst.msk [vmem:[%s570] sm:$0xff] %vm232, %v568
    %s572 = scalar_lea.vmem [#allocation4], 64
    %v573 = vld [vmem:[%s572] sm:$0xff]
    %v574 = vld [vmem:[%s572 + $0x8] sm:$0xff]
    %v575 = vsel %vm125, %v563, 0
    %577 = vmatprep.subr.mxu0 %v106
    %578 = vmatpush1.msra.mxu0 %v105
    %579 = vmatprep.subr.mxu0 %v108
    %580 = vmatpush1.msra.mxu0 %v107
    %581 = vmatprep.subr.mxu0 %v110
    %582 = vmatpush1.msra.mxu0 %v109
    %583 = vmatprep.subr.mxu0 %v112
    %584 = vmatpush1.msra.mxu0 %v111
    %585 = vmatprep.subr.mxu0 %v114
    %586 = vmatpush1.msra.mxu0 %v113
    %587 = vmatprep.subr.mxu0 %v116
    %588 = vmatpush1.msra.mxu0 %v115
    %589 = vmatprep.subr.mxu0 %v118
    %590 = vmatpush1.msra.mxu0 %v117
    %591 = vmatprep.subr.mxu0 %v120
    %592 = vmatpush1.msra.mxu0 %v119
    %593 = vmatprep.subr.mxu0 0.0
    %594 = vmatpush1.msra.mxu0 0.0
    %595 = vmatprep.subr.mxu0 0.0
    %596 = vmatpush1.msra.mxu0 0.0
    %597 = vmatprep.subr.mxu0 0.0
    %598 = vmatpush1.msra.mxu0 0.0
    %599 = vmatprep.subr.mxu0 0.0
    %600 = vmatpush1.msra.mxu0 0.0
    %601 = vmatprep.subr.mxu0 0.0
    %602 = vmatpush1.msra.mxu0 0.0
    %603 = vmatprep.subr.mxu0 0.0
    %604 = vmatpush1.msra.mxu0 0.0
    %605 = vmatprep.subr.mxu0 0.0
    %606 = vmatpush1.msra.mxu0 0.0
    %607 = vmatprep.subr.mxu0 0.0
    %608 = vmatpush1.msra.mxu0 0.0
    %609 = vmatprep.subr.mxu0 0.0
    %610 = vmatpush1.msra.mxu0 0.0
    %611 = vmatprep.subr.mxu0 0.0
    %612 = vmatpush1.msra.mxu0 0.0
    %613 = vmatprep.subr.mxu0 0.0
    %614 = vmatpush1.msra.mxu0 0.0
    %615 = vmatprep.subr.mxu0 0.0
    %616 = vmatpush1.msra.mxu0 0.0
    %617 = vmatprep.subr.mxu0 0.0
    %618 = vmatpush1.msra.mxu0 0.0
    %619 = vmatprep.subr.mxu0 0.0
    %620 = vmatpush1.msra.mxu0 0.0
    %621 = vmatprep.subr.mxu0 0.0
    %622 = vmatpush1.msra.mxu0 0.0
    %623 = vmatprep.subr.mxu0 0.0
    %624 = vmatpush1.msra.mxu0 0.0
    %625 = vmatprep.subr.mxu0 0.0
    %626 = vmatpush1.msra.mxu0 0.0
    %627 = vmatprep.subr.mxu0 0.0
    %628 = vmatpush1.msra.mxu0 0.0
    %629 = vmatprep.subr.mxu0 0.0
    %630 = vmatpush1.msra.mxu0 0.0
    %631 = vmatprep.subr.mxu0 0.0
    %632 = vmatpush1.msra.mxu0 0.0
    %633 = vmatprep.subr.mxu0 0.0
    %634 = vmatpush1.msra.mxu0 0.0
    %635 = vmatprep.subr.mxu0 0.0
    %636 = vmatpush1.msra.mxu0 0.0
    %637 = vmatprep.subr.mxu0 0.0
    %638 = vmatpush1.msra.mxu0 0.0
    %639 = vmatprep.subr.mxu0 0.0
    %640 = vmatpush1.msra.mxu0 0.0
    %641 = vmatprep.mubr.f32.mxu0 0.0
    %642 = vmatmul.mubr.f32.gmra.mrb[0].mxu0 %v575
    %v643 = vpop.f32.mrb[0].mxu0
    %v644 = vadd.f32 0.0, %v643
    %v645 = vpop.f32.mrb[0].mxu0
    %v646 = vadd.f32 0.0, %v645
    %647 = vdwg.mxu0
    %v648 = vadd.f32 %v573, %v644
    %v649 = vadd.f32 %v574, %v646
    %v650 = vxor.u32 %v648, 2147483648
    %v651 = vmul.f32 %v650, 1.442695
    %v652 = vpow.pop %v651
    %v653 = vadd.f32 %v652, 1.0
    %v654 = vrcp.pop %v653
    %v655 = vmul.f32 1.0, %v654
    %v656 = vtanh.pop %v649
    %v657 = vxor.u32 %v649, 2147483648
    %v658 = vmul.f32 %v657, 1.442695
    %v659 = vpow.pop %v658
    %v660 = vadd.f32 %v659, 1.0
    %v661 = vrcp.pop %v660
    %v662 = vmul.f32 1.0, %v661
    %v663 = vmul.f32 %v655, %v558
    %v664 = vmul.f32 %v655, %v656
    %666 = vrot.lane.b32.xlu0 %v664, 64
    %v667 = vpop.permute.xlu0 %666
    %v669 = vadd.f32 %v663, %v667
    %v670 = vtanh.pop %v669
    %v671 = vmul.f32 %v662, %v670
    %673 = vrot.lane.b32.xlu0 %v671, 64
    %v674 = vpop.permute.xlu0 %673
    %s676 = scalar_lea.vmem [#allocation2], 32
    %677 = vst.msk [vmem:[%s676] sm:$0xff] %vm232, %v674
    %678 = vrot.lane.b32.xlu0 %v671, 32
    %v679 = vpop.permute.xlu0 %678
    %s681 = scalar_lea.vmem [#allocation3], 24
    %682 = vst.msk [vmem:[%s681] sm:$0xff] %vm232, %v679
    %s683 = scalar_lea.vmem [#allocation4], 80
    %v684 = vld [vmem:[%s683] sm:$0xff]
    %v685 = vld [vmem:[%s683 + $0x8] sm:$0xff]
    %v686 = vsel %vm125, %v674, 0
    %688 = vmatprep.subr.mxu0 %v106
    %689 = vmatpush1.msra.mxu0 %v105
    %690 = vmatprep.subr.mxu0 %v108
    %691 = vmatpush1.msra.mxu0 %v107
    %692 = vmatprep.subr.mxu0 %v110
    %693 = vmatpush1.msra.mxu0 %v109
    %694 = vmatprep.subr.mxu0 %v112
    %695 = vmatpush1.msra.mxu0 %v111
    %696 = vmatprep.subr.mxu0 %v114
    %697 = vmatpush1.msra.mxu0 %v113
    %698 = vmatprep.subr.mxu0 %v116
    %699 = vmatpush1.msra.mxu0 %v115
    %700 = vmatprep.subr.mxu0 %v118
    %701 = vmatpush1.msra.mxu0 %v117
    %702 = vmatprep.subr.mxu0 %v120
    %703 = vmatpush1.msra.mxu0 %v119
    %704 = vmatprep.subr.mxu0 0.0
    %705 = vmatpush1.msra.mxu0 0.0
    %706 = vmatprep.subr.mxu0 0.0
    %707 = vmatpush1.msra.mxu0 0.0
    %708 = vmatprep.subr.mxu0 0.0
    %709 = vmatpush1.msra.mxu0 0.0
    %710 = vmatprep.subr.mxu0 0.0
    %711 = vmatpush1.msra.mxu0 0.0
    %712 = vmatprep.subr.mxu0 0.0
    %713 = vmatpush1.msra.mxu0 0.0
    %714 = vmatprep.subr.mxu0 0.0
    %715 = vmatpush1.msra.mxu0 0.0
    %716 = vmatprep.subr.mxu0 0.0
    %717 = vmatpush1.msra.mxu0 0.0
    %718 = vmatprep.subr.mxu0 0.0
    %719 = vmatpush1.msra.mxu0 0.0
    %720 = vmatprep.subr.mxu0 0.0
    %721 = vmatpush1.msra.mxu0 0.0
    %722 = vmatprep.subr.mxu0 0.0
    %723 = vmatpush1.msra.mxu0 0.0
    %724 = vmatprep.subr.mxu0 0.0
    %725 = vmatpush1.msra.mxu0 0.0
    %726 = vmatprep.subr.mxu0 0.0
    %727 = vmatpush1.msra.mxu0 0.0
    %728 = vmatprep.subr.mxu0 0.0
    %729 = vmatpush1.msra.mxu0 0.0
    %730 = vmatprep.subr.mxu0 0.0
    %731 = vmatpush1.msra.mxu0 0.0
    %732 = vmatprep.subr.mxu0 0.0
    %733 = vmatpush1.msra.mxu0 0.0
    %734 = vmatprep.subr.mxu0 0.0
    %735 = vmatpush1.msra.mxu0 0.0
    %736 = vmatprep.subr.mxu0 0.0
    %737 = vmatpush1.msra.mxu0 0.0
    %738 = vmatprep.subr.mxu0 0.0
    %739 = vmatpush1.msra.mxu0 0.0
    %740 = vmatprep.subr.mxu0 0.0
    %741 = vmatpush1.msra.mxu0 0.0
    %742 = vmatprep.subr.mxu0 0.0
    %743 = vmatpush1.msra.mxu0 0.0
    %744 = vmatprep.subr.mxu0 0.0
    %745 = vmatpush1.msra.mxu0 0.0
    %746 = vmatprep.subr.mxu0 0.0
    %747 = vmatpush1.msra.mxu0 0.0
    %748 = vmatprep.subr.mxu0 0.0
    %749 = vmatpush1.msra.mxu0 0.0
    %750 = vmatprep.subr.mxu0 0.0
    %751 = vmatpush1.msra.mxu0 0.0
    %752 = vmatprep.mubr.f32.mxu0 0.0
    %753 = vmatmul.mubr.f32.gmra.mrb[0].mxu0 %v686
    %v754 = vpop.f32.mrb[0].mxu0
    %v755 = vadd.f32 0.0, %v754
    %v756 = vpop.f32.mrb[0].mxu0
    %v757 = vadd.f32 0.0, %v756
    %758 = vdwg.mxu0
    %v759 = vadd.f32 %v684, %v755
    %v760 = vadd.f32 %v685, %v757
    %v761 = vxor.u32 %v759, 2147483648
    %v762 = vmul.f32 %v761, 1.442695
    %v763 = vpow.pop %v762
    %v764 = vadd.f32 %v763, 1.0
    %v765 = vrcp.pop %v764
    %v766 = vmul.f32 1.0, %v765
    %v767 = vtanh.pop %v760
    %v768 = vxor.u32 %v760, 2147483648
    %v769 = vmul.f32 %v768, 1.442695
    %v770 = vpow.pop %v769
    %v771 = vadd.f32 %v770, 1.0
    %v772 = vrcp.pop %v771
    %v773 = vmul.f32 1.0, %v772
    %v774 = vmul.f32 %v766, %v669
    %v775 = vmul.f32 %v766, %v767
    %777 = vrot.lane.b32.xlu0 %v775, 64
    %v778 = vpop.permute.xlu0 %777
    %v780 = vadd.f32 %v774, %v778
    %v781 = vtanh.pop %v780
    %v782 = vmul.f32 %v773, %v781
    %784 = vrot.lane.b32.xlu0 %v782, 64
    %v785 = vpop.permute.xlu0 %784
    %s787 = scalar_lea.vmem [#allocation2], 40
    %788 = vst.msk [vmem:[%s787] sm:$0xff] %vm232, %v785
    %789 = vrot.lane.b32.xlu0 %v782, 32
    %v790 = vpop.permute.xlu0 %789
    %s792 = scalar_lea.vmem [#allocation3], 16
    %793 = vst.msk [vmem:[%s792] sm:$0xff] %vm232, %v790
    %s794 = scalar_lea.vmem [#allocation4], 96
    %v795 = vld [vmem:[%s794] sm:$0xff]
    %v796 = vld [vmem:[%s794 + $0x8] sm:$0xff]
    %v797 = vsel %vm125, %v785, 0
    %799 = vmatprep.subr.mxu0 %v106
    %800 = vmatpush1.msra.mxu0 %v105
    %801 = vmatprep.subr.mxu0 %v108
    %802 = vmatpush1.msra.mxu0 %v107
    %803 = vmatprep.subr.mxu0 %v110
    %804 = vmatpush1.msra.mxu0 %v109
    %805 = vmatprep.subr.mxu0 %v112
    %806 = vmatpush1.msra.mxu0 %v111
    %807 = vmatprep.subr.mxu0 %v114
    %808 = vmatpush1.msra.mxu0 %v113
    %809 = vmatprep.subr.mxu0 %v116
    %810 = vmatpush1.msra.mxu0 %v115
    %811 = vmatprep.subr.mxu0 %v118
    %812 = vmatpush1.msra.mxu0 %v117
    %813 = vmatprep.subr.mxu0 %v120
    %814 = vmatpush1.msra.mxu0 %v119
    %815 = vmatprep.subr.mxu0 0.0
    %816 = vmatpush1.msra.mxu0 0.0
    %817 = vmatprep.subr.mxu0 0.0
    %818 = vmatpush1.msra.mxu0 0.0
    %819 = vmatprep.subr.mxu0 0.0
    %820 = vmatpush1.msra.mxu0 0.0
    %821 = vmatprep.subr.mxu0 0.0
    %822 = vmatpush1.msra.mxu0 0.0
    %823 = vmatprep.subr.mxu0 0.0
    %824 = vmatpush1.msra.mxu0 0.0
    %825 = vmatprep.subr.mxu0 0.0
    %826 = vmatpush1.msra.mxu0 0.0
    %827 = vmatprep.subr.mxu0 0.0
    %828 = vmatpush1.msra.mxu0 0.0
    %829 = vmatprep.subr.mxu0 0.0
    %830 = vmatpush1.msra.mxu0 0.0
    %831 = vmatprep.subr.mxu0 0.0
    %832 = vmatpush1.msra.mxu0 0.0
    %833 = vmatprep.subr.mxu0 0.0
    %834 = vmatpush1.msra.mxu0 0.0
    %835 = vmatprep.subr.mxu0 0.0
    %836 = vmatpush1.msra.mxu0 0.0
    %837 = vmatprep.subr.mxu0 0.0
    %838 = vmatpush1.msra.mxu0 0.0
    %839 = vmatprep.subr.mxu0 0.0
    %840 = vmatpush1.msra.mxu0 0.0
    %841 = vmatprep.subr.mxu0 0.0
    %842 = vmatpush1.msra.mxu0 0.0
    %843 = vmatprep.subr.mxu0 0.0
    %844 = vmatpush1.msra.mxu0 0.0
    %845 = vmatprep.subr.mxu0 0.0
    %846 = vmatpush1.msra.mxu0 0.0
    %847 = vmatprep.subr.mxu0 0.0
    %848 = vmatpush1.msra.mxu0 0.0
    %849 = vmatprep.subr.mxu0 0.0
    %850 = vmatpush1.msra.mxu0 0.0
    %851 = vmatprep.subr.mxu0 0.0
    %852 = vmatpush1.msra.mxu0 0.0
    %853 = vmatprep.subr.mxu0 0.0
    %854 = vmatpush1.msra.mxu0 0.0
    %855 = vmatprep.subr.mxu0 0.0
    %856 = vmatpush1.msra.mxu0 0.0
    %857 = vmatprep.subr.mxu0 0.0
    %858 = vmatpush1.msra.mxu0 0.0
    %859 = vmatprep.subr.mxu0 0.0
    %860 = vmatpush1.msra.mxu0 0.0
    %861 = vmatprep.subr.mxu0 0.0
    %862 = vmatpush1.msra.mxu0 0.0
    %863 = vmatprep.mubr.f32.mxu0 0.0
    %864 = vmatmul.mubr.f32.gmra.mrb[0].mxu0 %v797
    %v865 = vpop.f32.mrb[0].mxu0
    %v866 = vadd.f32 0.0, %v865
    %v867 = vpop.f32.mrb[0].mxu0
    %v868 = vadd.f32 0.0, %v867
    %869 = vdwg.mxu0
    %v870 = vadd.f32 %v795, %v866
    %v871 = vadd.f32 %v796, %v868
    %v872 = vxor.u32 %v870, 2147483648
    %v873 = vmul.f32 %v872, 1.442695
    %v874 = vpow.pop %v873
    %v875 = vadd.f32 %v874, 1.0
    %v876 = vrcp.pop %v875
    %v877 = vmul.f32 1.0, %v876
    %v878 = vtanh.pop %v871
    %v879 = vxor.u32 %v871, 2147483648
    %v880 = vmul.f32 %v879, 1.442695
    %v881 = vpow.pop %v880
    %v882 = vadd.f32 %v881, 1.0
    %v883 = vrcp.pop %v882
    %v884 = vmul.f32 1.0, %v883
    %v885 = vmul.f32 %v877, %v780
    %v886 = vmul.f32 %v877, %v878
    %888 = vrot.lane.b32.xlu0 %v886, 64
    %v889 = vpop.permute.xlu0 %888
    %v891 = vadd.f32 %v885, %v889
    %v892 = vtanh.pop %v891
    %v893 = vmul.f32 %v884, %v892
    %895 = vrot.lane.b32.xlu0 %v893, 64
    %v896 = vpop.permute.xlu0 %895
    %s898 = scalar_lea.vmem [#allocation2], 48
    %899 = vst.msk [vmem:[%s898] sm:$0xff] %vm232, %v896
    %900 = vrot.lane.b32.xlu0 %v893, 32
    %v901 = vpop.permute.xlu0 %900
    %s903 = scalar_lea.vmem [#allocation3], 8
    %904 = vst.msk [vmem:[%s903] sm:$0xff] %vm232, %v901
    %s905 = scalar_lea.vmem [#allocation4], 112
    %v906 = vld [vmem:[%s905] sm:$0xff]
    %v907 = vld [vmem:[%s905 + $0x8] sm:$0xff]
    %v908 = vsel %vm125, %v896, 0
    %910 = vmatprep.subr.mxu0 %v106
    %911 = vmatpush1.msra.mxu0 %v105
    %912 = vmatprep.subr.mxu0 %v108
    %913 = vmatpush1.msra.mxu0 %v107
    %914 = vmatprep.subr.mxu0 %v110
    %915 = vmatpush1.msra.mxu0 %v109
    %916 = vmatprep.subr.mxu0 %v112
    %917 = vmatpush1.msra.mxu0 %v111
    %918 = vmatprep.subr.mxu0 %v114
    %919 = vmatpush1.msra.mxu0 %v113
    %920 = vmatprep.subr.mxu0 %v116
    %921 = vmatpush1.msra.mxu0 %v115
    %922 = vmatprep.subr.mxu0 %v118
    %923 = vmatpush1.msra.mxu0 %v117
    %924 = vmatprep.subr.mxu0 %v120
    %925 = vmatpush1.msra.mxu0 %v119
    %926 = vmatprep.subr.mxu0 0.0
    %927 = vmatpush1.msra.mxu0 0.0
    %928 = vmatprep.subr.mxu0 0.0
    %929 = vmatpush1.msra.mxu0 0.0
    %930 = vmatprep.subr.mxu0 0.0
    %931 = vmatpush1.msra.mxu0 0.0
    %932 = vmatprep.subr.mxu0 0.0
    %933 = vmatpush1.msra.mxu0 0.0
    %934 = vmatprep.subr.mxu0 0.0
    %935 = vmatpush1.msra.mxu0 0.0
    %936 = vmatprep.subr.mxu0 0.0
    %937 = vmatpush1.msra.mxu0 0.0
    %938 = vmatprep.subr.mxu0 0.0
    %939 = vmatpush1.msra.mxu0 0.0
    %940 = vmatprep.subr.mxu0 0.0
    %941 = vmatpush1.msra.mxu0 0.0
    %942 = vmatprep.subr.mxu0 0.0
    %943 = vmatpush1.msra.mxu0 0.0
    %944 = vmatprep.subr.mxu0 0.0
    %945 = vmatpush1.msra.mxu0 0.0
    %946 = vmatprep.subr.mxu0 0.0
    %947 = vmatpush1.msra.mxu0 0.0
    %948 = vmatprep.subr.mxu0 0.0
    %949 = vmatpush1.msra.mxu0 0.0
    %950 = vmatprep.subr.mxu0 0.0
    %951 = vmatpush1.msra.mxu0 0.0
    %952 = vmatprep.subr.mxu0 0.0
    %953 = vmatpush1.msra.mxu0 0.0
    %954 = vmatprep.subr.mxu0 0.0
    %955 = vmatpush1.msra.mxu0 0.0
    %956 = vmatprep.subr.mxu0 0.0
    %957 = vmatpush1.msra.mxu0 0.0
    %958 = vmatprep.subr.mxu0 0.0
    %959 = vmatpush1.msra.mxu0 0.0
    %960 = vmatprep.subr.mxu0 0.0
    %961 = vmatpush1.msra.mxu0 0.0
    %962 = vmatprep.subr.mxu0 0.0
    %963 = vmatpush1.msra.mxu0 0.0
    %964 = vmatprep.subr.mxu0 0.0
    %965 = vmatpush1.msra.mxu0 0.0
    %966 = vmatprep.subr.mxu0 0.0
    %967 = vmatpush1.msra.mxu0 0.0
    %968 = vmatprep.subr.mxu0 0.0
    %969 = vmatpush1.msra.mxu0 0.0
    %970 = vmatprep.subr.mxu0 0.0
    %971 = vmatpush1.msra.mxu0 0.0
    %972 = vmatprep.subr.mxu0 0.0
    %973 = vmatpush1.msra.mxu0 0.0
    %974 = vmatprep.mubr.f32.mxu0 0.0
    %975 = vmatmul.mubr.f32.gmra.mrb[0].mxu0 %v908
    %v976 = vpop.f32.mrb[0].mxu0
    %v977 = vadd.f32 0.0, %v976
    %v978 = vpop.f32.mrb[0].mxu0
    %v979 = vadd.f32 0.0, %v978
    %980 = vdwg.mxu0
    %v981 = vadd.f32 %v906, %v977
    %v982 = vadd.f32 %v907, %v979
    %v983 = vxor.u32 %v981, 2147483648
    %v984 = vmul.f32 %v983, 1.442695
    %v985 = vpow.pop %v984
    %v986 = vadd.f32 %v985, 1.0
    %v987 = vrcp.pop %v986
    %v988 = vmul.f32 1.0, %v987
    %v989 = vtanh.pop %v982
    %v990 = vxor.u32 %v982, 2147483648
    %v991 = vmul.f32 %v990, 1.442695
    %v992 = vpow.pop %v991
    %v993 = vadd.f32 %v992, 1.0
    %v994 = vrcp.pop %v993
    %v995 = vmul.f32 1.0, %v994
    %v996 = vmul.f32 %v988, %v891
    %v997 = vmul.f32 %v988, %v989
    %999 = vrot.lane.b32.xlu0 %v997, 64
    %v1000 = vpop.permute.xlu0 %999
    %v1002 = vadd.f32 %v996, %v1000
    %v1003 = vtanh.pop %v1002
    %v1004 = vmul.f32 %v995, %v1003
    %1006 = vrot.lane.b32.xlu0 %v1004, 64
    %v1007 = vpop.permute.xlu0 %1006
    %s1009 = scalar_lea.vmem [#allocation2], 56
    %1010 = vst.msk [vmem:[%s1009] sm:$0xff] %vm232, %v1007
    %1011 = vrot.lane.b32.xlu0 %v1004, 32
    %v1012 = vpop.permute.xlu0 %1011
    %1014 = vst.msk [vmem:[#allocation3] sm:$0xff] %vm232, %v1012
    %v1015 = vld [vmem:[#allocation2] sm:$0xff]
    %v1016 = vld [vmem:[#allocation2 + $0x8] sm:$0xff]
    %v1017 = vld [vmem:[#allocation2 + $0x10] sm:$0xff]
    %v1018 = vld [vmem:[#allocation2 + $0x18] sm:$0xff]
    %v1019 = vld [vmem:[#allocation2 + $0x20] sm:$0xff]
    %v1020 = vld [vmem:[#allocation2 + $0x28] sm:$0xff]
    %v1021 = vld [vmem:[#allocation2 + $0x30] sm:$0xff]
    %v1022 = vld [vmem:[#allocation2 + $0x38] sm:$0xff]
    %v1023 = vld [vmem:[#allocation3] sm:$0xff]
    %v1024 = vld [vmem:[#allocation3 + $0x8] sm:$0xff]
    %v1025 = vld [vmem:[#allocation3 + $0x10] sm:$0xff]
    %v1026 = vld [vmem:[#allocation3 + $0x18] sm:$0xff]
    %v1027 = vld [vmem:[#allocation3 + $0x20] sm:$0xff]
    %v1028 = vld [vmem:[#allocation3 + $0x28] sm:$0xff]
    %v1029 = vld [vmem:[#allocation3 + $0x30] sm:$0xff]
    %v1030 = vld [vmem:[#allocation3 + $0x38] sm:$0xff]
    %v1031 = vmul.f32 %v1015, %v1007
    %v1032 = vmul.f32 %v1016, %v1007
    %v1033 = vmul.f32 %v1017, %v1007
    %v1034 = vmul.f32 %v1018, %v1007
    %v1035 = vmul.f32 %v1019, %v1007
    %v1036 = vmul.f32 %v1020, %v1007
    %v1037 = vmul.f32 %v1021, %v1007
    %v1038 = vmul.f32 %v1022, %v1007
    %v1039 = vsel %vm232, %v1031, 0.0
    %1040 = vadd.xlane.f32.xlu0 %v1039
    %v1041 = vpop.xlane.xlu0 %1040
    %v1042 = vsel %vm232, %v1032, 0.0
    %1043 = vadd.xlane.f32.xlu0 %v1042
    %v1044 = vpop.xlane.xlu0 %1043
    %v1045 = vsel %vm232, %v1033, 0.0
    %1046 = vadd.xlane.f32.xlu0 %v1045
    %v1047 = vpop.xlane.xlu0 %1046
    %v1048 = vsel %vm232, %v1034, 0.0
    %1049 = vadd.xlane.f32.xlu0 %v1048
    %v1050 = vpop.xlane.xlu0 %1049
    %v1051 = vsel %vm232, %v1035, 0.0
    %1052 = vadd.xlane.f32.xlu0 %v1051
    %v1053 = vpop.xlane.xlu0 %1052
    %v1054 = vsel %vm232, %v1036, 0.0
    %1055 = vadd.xlane.f32.xlu0 %v1054
    %v1056 = vpop.xlane.xlu0 %1055
    %v1057 = vsel %vm232, %v1037, 0.0
    %1058 = vadd.xlane.f32.xlu0 %v1057
    %v1059 = vpop.xlane.xlu0 %1058
    %v1060 = vsel %vm232, %v1038, 0.0
    %1061 = vadd.xlane.f32.xlu0 %v1060
    %v1062 = vpop.xlane.xlu0 %1061
    %v1063 = vmul.f32 %v1023, %v1012
    %v1064 = vmul.f32 %v1024, %v1012
    %v1065 = vmul.f32 %v1025, %v1012
    %v1066 = vmul.f32 %v1026, %v1012
    %v1067 = vmul.f32 %v1027, %v1012
    %v1068 = vmul.f32 %v1028, %v1012
    %v1069 = vmul.f32 %v1029, %v1012
    %v1070 = vmul.f32 %v1030, %v1012
    %v1071 = vsel %vm232, %v1063, 0.0
    %1072 = vadd.xlane.f32.xlu0 %v1071
    %v1073 = vpop.xlane.xlu0 %1072
    %v1074 = vsel %vm232, %v1064, 0.0
    %1075 = vadd.xlane.f32.xlu0 %v1074
    %v1076 = vpop.xlane.xlu0 %1075
    %v1077 = vsel %vm232, %v1065, 0.0
    %1078 = vadd.xlane.f32.xlu0 %v1077
    %v1079 = vpop.xlane.xlu0 %1078
    %v1080 = vsel %vm232, %v1066, 0.0
    %1081 = vadd.xlane.f32.xlu0 %v1080
    %v1082 = vpop.xlane.xlu0 %1081
    %v1083 = vsel %vm232, %v1067, 0.0
    %1084 = vadd.xlane.f32.xlu0 %v1083
    %v1085 = vpop.xlane.xlu0 %1084
    %v1086 = vsel %vm232, %v1068, 0.0
    %1087 = vadd.xlane.f32.xlu0 %v1086
    %v1088 = vpop.xlane.xlu0 %1087
    %v1089 = vsel %vm232, %v1069, 0.0
    %1090 = vadd.xlane.f32.xlu0 %v1089
    %v1091 = vpop.xlane.xlu0 %1090
    %v1092 = vsel %vm232, %v1070, 0.0
    %1093 = vadd.xlane.f32.xlu0 %v1092
    %v1094 = vpop.xlane.xlu0 %1093
    %v1095 = vadd.f32 %v1041, %v1073
    %v1096 = vadd.f32 %v1044, %v1076
    %v1097 = vadd.f32 %v1047, %v1079
    %v1098 = vadd.f32 %v1050, %v1082
    %v1099 = vadd.f32 %v1053, %v1085
    %v1100 = vadd.f32 %v1056, %v1088
    %v1101 = vadd.f32 %v1059, %v1091
    %v1102 = vadd.f32 %v1062, %v1094
    %v1103 = vmax.f32 %v1095, %v1099
    %v1104 = vmax.f32 %v1096, %v1100
    %v1105 = vmax.f32 %v1097, %v1101
    %v1106 = vmax.f32 %v1098, %v1102
    %v1107 = vmax.f32 %v1103, %v1104
    %v1108 = vmax.f32 %v1105, %v1106
    %v1109 = vmax.f32 %v1107, %v1108
    %v1110 = vsub.f32 %v1095, %v1109
    %v1111 = vsub.f32 %v1096, %v1109
    %v1112 = vsub.f32 %v1097, %v1109
    %v1113 = vsub.f32 %v1098, %v1109
    %v1114 = vsub.f32 %v1099, %v1109
    %v1115 = vsub.f32 %v1100, %v1109
    %v1116 = vsub.f32 %v1101, %v1109
    %v1117 = vsub.f32 %v1102, %v1109
    %v1118 = vmul.f32 %v1110, 1.442695
    %v1119 = vpow.pop %v1118
    %v1120 = vmul.f32 %v1111, 1.442695
    %v1121 = vpow.pop %v1120
    %v1122 = vmul.f32 %v1112, 1.442695
    %v1123 = vpow.pop %v1122
    %v1124 = vmul.f32 %v1113, 1.442695
    %v1125 = vpow.pop %v1124
    %v1126 = vmul.f32 %v1114, 1.442695
    %v1127 = vpow.pop %v1126
    %v1128 = vmul.f32 %v1115, 1.442695
    %v1129 = vpow.pop %v1128
    %v1130 = vmul.f32 %v1116, 1.442695
    %v1131 = vpow.pop %v1130
    %v1132 = vmul.f32 %v1117, 1.442695
    %v1133 = vpow.pop %v1132
    %v1134 = vadd.f32 %v1119, %v1121
    %v1135 = vadd.f32 %v1134, %v1123
    %v1136 = vadd.f32 %v1135, %v1125
    %v1137 = vadd.f32 %v1136, %v1127
    %v1138 = vadd.f32 %v1137, %v1129
    %v1139 = vadd.f32 %v1138, %v1131
    %v1140 = vadd.f32 %v1139, %v1133
    %v1141 = vrcp.pop %v1140
    %v1142 = vmul.f32 %v1119, %v1141
    %v1143 = vmul.f32 %v1121, %v1141
    %v1144 = vmul.f32 %v1123, %v1141
    %v1145 = vmul.f32 %v1125, %v1141
    %v1146 = vmul.f32 %v1127, %v1141
    %v1147 = vmul.f32 %v1129, %v1141
    %v1148 = vmul.f32 %v1131, %v1141
    %v1149 = vmul.f32 %v1133, %v1141
    %v1150 = vmul.f32 %v1015, %v1142
    %v1151 = vmul.f32 %v1016, %v1143
    %v1152 = vmul.f32 %v1017, %v1144
    %v1153 = vmul.f32 %v1018, %v1145
    %v1154 = vmul.f32 %v1019, %v1146
    %v1155 = vmul.f32 %v1020, %v1147
    %v1156 = vmul.f32 %v1021, %v1148
    %v1157 = vmul.f32 %v1022, %v1149
    %v1158 = vsel %vm232, %v1150, 0.0
    %v1159 = vsel %vm232, %v1151, 0.0
    %v1160 = vadd.f32 %v1158, %v1159
    %v1161 = vsel %vm232, %v1152, 0.0
    %v1162 = vadd.f32 %v1160, %v1161
    %v1163 = vsel %vm232, %v1153, 0.0
    %v1164 = vadd.f32 %v1162, %v1163
    %v1165 = vsel %vm232, %v1154, 0.0
    %v1166 = vadd.f32 %v1164, %v1165
    %v1167 = vsel %vm232, %v1155, 0.0
    %v1168 = vadd.f32 %v1166, %v1167
    %v1169 = vsel %vm232, %v1156, 0.0
    %v1170 = vadd.f32 %v1168, %v1169
    %v1171 = vsel %vm232, %v1157, 0.0
    %v1172 = vadd.f32 %v1170, %v1171
    %v1173 = vmul.f32 %v1023, %v1142
    %v1174 = vmul.f32 %v1024, %v1143
    %v1175 = vmul.f32 %v1025, %v1144
    %v1176 = vmul.f32 %v1026, %v1145
    %v1177 = vmul.f32 %v1027, %v1146
    %v1178 = vmul.f32 %v1028, %v1147
    %v1179 = vmul.f32 %v1029, %v1148
    %v1180 = vmul.f32 %v1030, %v1149
    %v1181 = vsel %vm232, %v1173, 0.0
    %v1182 = vsel %vm232, %v1174, 0.0
    %v1183 = vadd.f32 %v1181, %v1182
    %v1184 = vsel %vm232, %v1175, 0.0
    %v1185 = vadd.f32 %v1183, %v1184
    %v1186 = vsel %vm232, %v1176, 0.0
    %v1187 = vadd.f32 %v1185, %v1186
    %v1188 = vsel %vm232, %v1177, 0.0
    %v1189 = vadd.f32 %v1187, %v1188
    %v1190 = vsel %vm232, %v1178, 0.0
    %v1191 = vadd.f32 %v1189, %v1190
    %v1192 = vsel %vm232, %v1179, 0.0
    %v1193 = vadd.f32 %v1191, %v1192
    %v1194 = vsel %vm232, %v1180, 0.0
    %v1195 = vadd.f32 %v1193, %v1194
    %v1196 = vld [vmem:[#allocation12] sm:$0xff]
    %v1197 = vld [vmem:[#allocation12 + $0x8] sm:$0xff]
    %v1198 = vld [vmem:[#allocation12 + $0x10] sm:$0xff]
    %v1199 = vld [vmem:[#allocation12 + $0x18] sm:$0xff]
    %v1200 = vld [vmem:[#allocation13] sm:$0xff]
    %v1201 = vld [vmem:[#allocation13 + $0x8] sm:$0xff]
    %v1202 = vld [vmem:[#allocation13 + $0x10] sm:$0xff]
    %v1203 = vld [vmem:[#allocation13 + $0x18] sm:$0xff]
    %v1205 = vsel %vm232, %v1195, 0
    %1207 = vmatprep.subr.mxu0 0.0
    %1208 = vmatpush1.msra.mxu0 %v1200
    %1209 = vmatprep.subr.mxu0 0.0
    %1210 = vmatpush1.msra.mxu0 %v1201
    %1211 = vmatprep.subr.mxu0 0.0
    %1212 = vmatpush1.msra.mxu0 %v1202
    %1213 = vmatprep.subr.mxu0 0.0
    %1214 = vmatpush1.msra.mxu0 %v1203
    %1215 = vmatprep.subr.mxu0 0.0
    %1216 = vmatpush1.msra.mxu0 0.0
    %1217 = vmatprep.subr.mxu0 0.0
    %1218 = vmatpush1.msra.mxu0 0.0
    %1219 = vmatprep.subr.mxu0 0.0
    %1220 = vmatpush1.msra.mxu0 0.0
    %1221 = vmatprep.subr.mxu0 0.0
    %1222 = vmatpush1.msra.mxu0 0.0
    %1223 = vmatprep.subr.mxu0 0.0
    %1224 = vmatpush1.msra.mxu0 0.0
    %1225 = vmatprep.subr.mxu0 0.0
    %1226 = vmatpush1.msra.mxu0 0.0
    %1227 = vmatprep.subr.mxu0 0.0
    %1228 = vmatpush1.msra.mxu0 0.0
    %1229 = vmatprep.subr.mxu0 0.0
    %1230 = vmatpush1.msra.mxu0 0.0
    %1231 = vmatprep.subr.mxu0 0.0
    %1232 = vmatpush1.msra.mxu0 0.0
    %1233 = vmatprep.subr.mxu0 0.0
    %1234 = vmatpush1.msra.mxu0 0.0
    %1235 = vmatprep.subr.mxu0 0.0
    %1236 = vmatpush1.msra.mxu0 0.0
    %1237 = vmatprep.subr.mxu0 0.0
    %1238 = vmatpush1.msra.mxu0 0.0
    %1239 = vmatprep.subr.mxu0 0.0
    %1240 = vmatpush1.msra.mxu0 0.0
    %1241 = vmatprep.subr.mxu0 0.0
    %1242 = vmatpush1.msra.mxu0 0.0
    %1243 = vmatprep.subr.mxu0 0.0
    %1244 = vmatpush1.msra.mxu0 0.0
    %1245 = vmatprep.subr.mxu0 0.0
    %1246 = vmatpush1.msra.mxu0 0.0
    %1247 = vmatprep.subr.mxu0 0.0
    %1248 = vmatpush1.msra.mxu0 0.0
    %1249 = vmatprep.subr.mxu0 0.0
    %1250 = vmatpush1.msra.mxu0 0.0
    %1251 = vmatprep.subr.mxu0 0.0
    %1252 = vmatpush1.msra.mxu0 0.0
    %1253 = vmatprep.subr.mxu0 0.0
    %1254 = vmatpush1.msra.mxu0 0.0
    %1255 = vmatprep.subr.mxu0 0.0
    %1256 = vmatpush1.msra.mxu0 0.0
    %1257 = vmatprep.subr.mxu0 0.0
    %1258 = vmatpush1.msra.mxu0 0.0
    %1259 = vmatprep.subr.mxu0 0.0
    %1260 = vmatpush1.msra.mxu0 0.0
    %1261 = vmatprep.subr.mxu0 0.0
    %1262 = vmatpush1.msra.mxu0 0.0
    %1263 = vmatprep.subr.mxu0 0.0
    %1264 = vmatpush1.msra.mxu0 0.0
    %1265 = vmatprep.subr.mxu0 0.0
    %1266 = vmatpush1.msra.mxu0 0.0
    %1267 = vmatprep.subr.mxu0 0.0
    %1268 = vmatpush1.msra.mxu0 0.0
    %1269 = vmatprep.subr.mxu0 0.0
    %1270 = vmatpush1.msra.mxu0 0.0
    %1271 = vmatprep.mubr.f32.mxu0 0.0
    %1272 = vmatmul.mubr.f32.gmra.mrb[0].mxu0 %v1205
    %v1273 = vpop.f32.mrb[0].mxu0
    %v1274 = vadd.f32 0.0, %v1273
    %v1275 = vpop.f32.mrb[0].mxu0
    %1276 = vdwg.mxu0
    %v1278 = vsel %vm232, %v1172, 0
    %1280 = vmatprep.subr.mxu0 0.0
    %1281 = vmatpush1.msra.mxu0 %v1196
    %1282 = vmatprep.subr.mxu0 0.0
    %1283 = vmatpush1.msra.mxu0 %v1197
    %1284 = vmatprep.subr.mxu0 0.0
    %1285 = vmatpush1.msra.mxu0 %v1198
    %1286 = vmatprep.subr.mxu0 0.0
    %1287 = vmatpush1.msra.mxu0 %v1199
    %1288 = vmatprep.subr.mxu0 0.0
    %1289 = vmatpush1.msra.mxu0 0.0
    %1290 = vmatprep.subr.mxu0 0.0
    %1291 = vmatpush1.msra.mxu0 0.0
    %1292 = vmatprep.subr.mxu0 0.0
    %1293 = vmatpush1.msra.mxu0 0.0
    %1294 = vmatprep.subr.mxu0 0.0
    %1295 = vmatpush1.msra.mxu0 0.0
    %1296 = vmatprep.subr.mxu0 0.0
    %1297 = vmatpush1.msra.mxu0 0.0
    %1298 = vmatprep.subr.mxu0 0.0
    %1299 = vmatpush1.msra.mxu0 0.0
    %1300 = vmatprep.subr.mxu0 0.0
    %1301 = vmatpush1.msra.mxu0 0.0
    %1302 = vmatprep.subr.mxu0 0.0
    %1303 = vmatpush1.msra.mxu0 0.0
    %1304 = vmatprep.subr.mxu0 0.0
    %1305 = vmatpush1.msra.mxu0 0.0
    %1306 = vmatprep.subr.mxu0 0.0
    %1307 = vmatpush1.msra.mxu0 0.0
    %1308 = vmatprep.subr.mxu0 0.0
    %1309 = vmatpush1.msra.mxu0 0.0
    %1310 = vmatprep.subr.mxu0 0.0
    %1311 = vmatpush1.msra.mxu0 0.0
    %1312 = vmatprep.subr.mxu0 0.0
    %1313 = vmatpush1.msra.mxu0 0.0
    %1314 = vmatprep.subr.mxu0 0.0
    %1315 = vmatpush1.msra.mxu0 0.0
    %1316 = vmatprep.subr.mxu0 0.0
    %1317 = vmatpush1.msra.mxu0 0.0
    %1318 = vmatprep.subr.mxu0 0.0
    %1319 = vmatpush1.msra.mxu0 0.0
    %1320 = vmatprep.subr.mxu0 0.0
    %1321 = vmatpush1.msra.mxu0 0.0
    %1322 = vmatprep.subr.mxu0 0.0
    %1323 = vmatpush1.msra.mxu0 0.0
    %1324 = vmatprep.subr.mxu0 0.0
    %1325 = vmatpush1.msra.mxu0 0.0
    %1326 = vmatprep.subr.mxu0 0.0
    %1327 = vmatpush1.msra.mxu0 0.0
    %1328 = vmatprep.subr.mxu0 0.0
    %1329 = vmatpush1.msra.mxu0 0.0
    %1330 = vmatprep.subr.mxu0 0.0
    %1331 = vmatpush1.msra.mxu0 0.0
    %1332 = vmatprep.subr.mxu0 0.0
    %1333 = vmatpush1.msra.mxu0 0.0
    %1334 = vmatprep.subr.mxu0 0.0
    %1335 = vmatpush1.msra.mxu0 0.0
    %1336 = vmatprep.subr.mxu0 0.0
    %1337 = vmatpush1.msra.mxu0 0.0
    %1338 = vmatprep.subr.mxu0 0.0
    %1339 = vmatpush1.msra.mxu0 0.0
    %1340 = vmatprep.subr.mxu0 0.0
    %1341 = vmatpush1.msra.mxu0 0.0
    %1342 = vmatprep.subr.mxu0 0.0
    %1343 = vmatpush1.msra.mxu0 0.0
    %1344 = vmatprep.mubr.f32.mxu0 0.0
    %1345 = vmatmul.mubr.f32.gmra.mrb[0].mxu0 %v1278
    %v1346 = vpop.f32.mrb[0].mxu0
    %v1347 = vadd.f32 %v1274, %v1346
    %v1348 = vpop.f32.mrb[0].mxu0
    %1349 = vdwg.mxu0
    %v1350 = vld [vmem:[%s6] sm:$0x1]
    %v1352 = vlaneseq
    %v1353 = vshrl.u32 %v1352, 7
    %v1354 = vsub.s32 0, %v1353
    %v1355 = vrot.slane %v1350, %v1354
    %v1357 = vadd.f32 %v1347, %v1355
    %1358 = vst [vmem:[#allocation15] sm:$0xff] %v1357
    // Predicated region
    $region54: #{tpu_custom_call.1} parent=1 // pred_check
      _
    $region55: #{tpu_custom_call.1} parent=1 // pred_check_branch
      %1360 = sbr.rel (0) target = $region57
    $region56: #{tpu_custom_call.1} parent=1 // pred_region
      %s1362 = ssub.s32 128, 128
      %1363 = vsyncadd [#allocation6], %s1362
      %s1365 = sshll.u32 [#allocation15], 4
      %s1366 = int_to_ptr.vmem [resolvable:$true] %s1365
      %1368 = dma.vmem_to_hbm [thread:$0]  %s1366, 128, %s7, [#allocation6]
    $region57: #{tpu_custom_call.1} parent=1 // pred_fallthru
      _
    // Predicated region
    $region58: #{tpu_custom_call.1} parent=1 // pred_check
      _
    $region59: #{tpu_custom_call.1} parent=1 // pred_check_branch
      %1370 = sbr.rel (0) target = $region61
    $region60: #{tpu_custom_call.1} parent=1 // pred_region
      %1371 = dma.done [#allocation6], 128
    $region61: #{tpu_custom_call.1} parent=1 // pred_fallthru
      _
    %1372 = vsyncpa [#allocation5], 1
    %1373 = vsyncpa [#allocation8], 1
    %1374 = vsyncpa [#allocation11], 1
    %1375 = vsyncpa [#allocation14], 1
    %1376 = vsyncpa [#allocation6], 1

</llo_original>
